<compile_context>
chip_gen: v7x
topology: tpu7x:2x2x1
jax: 0.10.0
libtpu: 0.0.40
codegen_flags: <defaults>
</compile_context>

<pallas_src>
import functools

import numpy as np

import jax
import jax.numpy as jnp
from jax import lax
from jax.experimental import pallas as pl
from jax.experimental.pallas import tpu as pltpu

LANE = 128   # TPU lane width (minor dim of a vreg)
SUB = 8      # TPU sublane width for f32


def _round_up(x, m):
    return (x + m - 1) // m * m


def emn_kernel(tok_ref, tab_ref, wT_ref, bias_ref, sent_ref, prob_ref, r2p_ref, b2r_ref,
               out_ref, *, DP, n_tok, inv_S):
    """One grid step = G stacked problems.

    tok_ref:  (R, n_tok) int32, R = G*BS_pad. Row r holds the story tokens of sentence
              (problem g = r//BS_pad, batch b = (r%BS_pad)//S, sentence s = (r%BS_pad)%S)
              followed by that batch's query tokens offset by +V; padding = sentinel (>= V2P).
    tab_ref:  (V2P, 3*DP) f32 fused table [[A|0|C], [0|B|0], zero pad rows].
    wT_ref:   (DP, VP) f32 pre-transposed Linear weight.
    bias_ref: (1, VP) f32.
    sent_ref: (R, S)  f32  sent[r, s]  = ((r % BS_pad) % S == s)
    prob_ref: (G, R)  f32  prob[g, r]  = (r // BS_pad == g)
    r2p_ref:  (R, G)  f32  transpose of prob.
    b2r_ref:  (O, R)  f32, O = G*B_pad; b2r[o, r] selects rows of (problem, batch) o.
    out_ref:  (O, VP) f32 relu(logits); pad rows/lanes sliced off outside.
    """
    R = tok_ref.shape[0]
    V2P = tab_ref.shape[0]

    # --- bag-of-words counts built in-kernel (no inflated one-hot DMA) -------------------
    tok = tok_ref[...]                                              # (R, n_tok) int32
    v_iota = lax.broadcasted_iota(jnp.int32, (R, V2P), 1)
    counts = jnp.zeros((R, V2P), jnp.float32)
    for w in range(n_tok):                                          # tiny static unroll
        counts = counts + (tok[:, w:w + 1] == v_iota).astype(jnp.float32)

    # --- one fused MXU matmul -> [A(story) | B(query) | C(story)] sums per story row -----
    emb = jnp.dot(counts, tab_ref[...], preferred_element_type=jnp.float32)  # (R, 3*DP)
    a_rows = emb[:, 0:DP]
    u_rep = emb[:, DP:2 * DP]      # u[g, b] already broadcast to each of its S story rows
    c_rows = emb[:, 2 * DP:3 * DP]

    sent = sent_ref[...]                                            # (R, S)

    # inner[g, s] = sum_b sum_d a[g,b,s,d] * u[g,b,d]   (attention shared across the batch)
    rowdot = jnp.sum(a_rows * u_rep, axis=1, keepdims=True)         # (R, 1)
    inner = jnp.dot(prob_ref[...], rowdot * sent,
                    preferred_element_type=jnp.float32)             # (G, S)

    # per-problem softmax over sentences; EUP reciprocal + one Newton step (full f32 acc.)
    m = jnp.max(inner, axis=-1, keepdims=True)
    e = jnp.exp(inner - m)
    den = jnp.sum(e, axis=-1, keepdims=True)
    inv = pl.reciprocal(den, approx=True)
    inv = inv * (2.0 - den * inv)
    p = e * inv                                                     # (G, S)

    # p_rows[r] = p[g(r), s(r)] via one tiny MXU broadcast + lane reduce (no reshapes)
    p_bcast = jnp.dot(r2p_ref[...], p, preferred_element_type=jnp.float32)   # (R, S)
    p_rows = jnp.sum(p_bcast * sent, axis=1, keepdims=True)          # (R, 1)

    # ten3[g, b] = sum_s p[g,s] * c[g,b,s,:] + u[g,b]  ==  b2r @ (c*p + u_rep/S)
    mix = c_rows * p_rows + u_rep * inv_S                            # (R, DP)
    ten3 = jnp.dot(b2r_ref[...], mix, preferred_element_type=jnp.float32)    # (O, DP)

    # final linear with the pre-transposed weight; lane/sublane-dense f32 store
    logits = jnp.dot(ten3, wT_ref[...], preferred_element_type=jnp.float32) + bias_ref[...]
    out_ref[...] = jnp.maximum(logits, 0.0)                          # (O, VP)


def prepare_params(params):
    """One-time parameter packing (outside the per-call path).

    The three embedding tables are fused into a single (V2P, 3*128) matmul operand laid out
    as [[A|0|C], [0|B|0]]: story ids hit the top half, query ids (offset by +V) hit the
    bottom half, so a single counts@table matmul yields a_rows, u_rep and c_rows per story
    row.  The Linear weight is stored pre-transposed as (128, VP)."""
    V, d = params["embedA"].shape
    DP = _round_up(d, LANE)
    VP = _round_up(V, LANE)
    V2P = _round_up(2 * V, SUB)

    def pad_tab(t):
        return jnp.pad(t.astype(jnp.float32), ((0, 0), (0, DP - d)))

    z = jnp.zeros((V, DP), jnp.float32)
    top = jnp.concatenate([pad_tab(params["embedA"]), z, pad_tab(params["embedC"])], axis=1)
    bot = jnp.concatenate([z, pad_tab(params["embedB"]), z], axis=1)
    tables = jnp.pad(jnp.concatenate([top, bot], axis=0),
                     ((0, V2P - 2 * V), (0, 0)))                            # (V2P, 3*DP)

    wT = jnp.pad(params["W"].astype(jnp.float32).T,
                 ((0, DP - d), (0, VP - V)))                                # (DP, VP), pre-T
    bias = jnp.pad(params["b"].astype(jnp.float32), (0, VP - V))[None, :]   # (1, VP)
    return {"tables": tables, "WT": wT, "b": bias}


def _pack_tokens(stories, queries, V, BS_pad, N_pad, sentinel):
    """(N,B,S,W) + (N,B,Q) int ids -> (N_pad*BS_pad, W+Q) int32 row-token matrix.
    Each story row also carries its batch's query tokens offset by +V; padding = sentinel.
    One fused XLA op per launch, amortized over all N problems."""
    N, B, S, W = stories.shape
    Q = queries.shape[-1]
    q_rep = jnp.broadcast_to(queries[:, :, None, :], (N, B, S, Q)) + V
    tok = jnp.concatenate([stories, q_rep], axis=-1).reshape(N, B * S, W + Q)
    tok = jnp.pad(tok, ((0, N_pad - N), (0, BS_pad - B * S), (0, 0)),
                  constant_values=sentinel)
    return tok.reshape(N_pad * BS_pad, W + Q).astype(jnp.int32)


def _selectors(G, B, S, BS_pad, B_pad):
    """0/1 selector matrices as compile-time numpy constants (per review: no per-call
    iota/compare/cast rebuild)."""
    R = G * BS_pad
    O = G * B_pad
    r = np.arange(R)
    g_of_r = r // BS_pad
    s_of_r = (r % BS_pad) % S
    b_of_r = (r % BS_pad) // S
    sent = (s_of_r[:, None] == np.arange(S)[None, :]).astype(np.float32)     # (R, S)
    prob = (np.arange(G)[:, None] == g_of_r[None, :]).astype(np.float32)     # (G, R)
    r2p = np.ascontiguousarray(prob.T)                                       # (R, G)
    o = np.arange(O)
    b2r = ((o[:, None] // B_pad == g_of_r[None, :]) &
           (o[:, None] % B_pad == b_of_r[None, :])).astype(np.float32)       # (O, R)
    return jnp.asarray(sent), jnp.asarray(prob), jnp.asarray(r2p), jnp.asarray(b2r)


@functools.partial(jax.jit, static_argnames=("V", "G"))
def emn_forward_batched(stories, queries, prep, *, V, G=8):
    """stories: (N, B, S, W) int32, queries: (N, B, Q) int32 -> (N, B, V) float32.
    Precondition: all token ids in [0, V)."""
    tables, wT, bias = prep["tables"], prep["WT"], prep["b"]
    V2P = tables.shape[0]
    DP = tables.shape[1] // 3
    VP = wT.shape[1]

    N, B, S, W = stories.shape
    Q = queries.shape[-1]
    n_tok = W + Q
    BS_pad = _round_up(B * S, SUB)
    B_pad = _round_up(B, SUB)
    N_pad = _round_up(N, G)
    R = G * BS_pad              # story rows per grid step (G stacked problems)
    O = G * B_pad               # output rows per grid step
    steps = N_pad // G

    sentinel = V2P              # never matches any iota column in the in-kernel counts
    tokens = _pack_tokens(stories, queries, V, BS_pad, N_pad, sentinel)   # (N_pad*BS_pad, n_tok)
    sent, prob, r2p, b2r = _selectors(G, B, S, BS_pad, B_pad)

    kernel = functools.partial(emn_kernel, DP=DP, n_tok=n_tok, inv_S=1.0 / S)

    flops = steps * 2 * (R * V2P * 3 * DP + G * R * S + R * G * S + O * R * DP + O * DP * VP)
    bytes_accessed = 4 * (tokens.size + tables.size + wT.size + bias.size
                          + sent.size + prob.size + r2p.size + b2r.size
                          + N_pad * B_pad * VP)

    out = pl.pallas_call(
        kernel,
        out_shape=jax.ShapeDtypeStruct((N_pad * B_pad, VP), jnp.float32),
        grid=(steps,),
        in_specs=[
            # per-step token tile (pipelined)
            pl.BlockSpec((R, n_tok), lambda i: (i, 0)),
            # constant-index blocks: DMA'd once, VMEM-resident across the whole grid
            pl.BlockSpec((V2P, 3 * DP), lambda i: (0, 0)),   # fused embedding table
            pl.BlockSpec((DP, VP), lambda i: (0, 0)),        # W^T (pre-transposed)
            pl.BlockSpec((1, VP), lambda i: (0, 0)),         # bias
            pl.BlockSpec((R, S), lambda i: (0, 0)),          # sent selector
            pl.BlockSpec((G, R), lambda i: (0, 0)),          # problem selector
            pl.BlockSpec((R, G), lambda i: (0, 0)),          # row -> problem broadcast
            pl.BlockSpec((O, R), lambda i: (0, 0)),          # (problem,batch) row sum
        ],
        out_specs=pl.BlockSpec((O, VP), lambda i: (i, 0)),
        compiler_params=pltpu.CompilerParams(dimension_semantics=("parallel",)),
        cost_estimate=pl.CostEstimate(flops=flops, transcendentals=steps * G * S,
                                      bytes_accessed=bytes_accessed),
    )(tokens, tables, wT, bias, sent, prob, r2p, b2r)

    return out.reshape(N_pad, B_pad, VP)[:N, :B, :V]


def emn_forward(story, query, prep, *, V, G=8):
    """Single-problem convenience wrapper: story (B, S, W), query (B, Q) -> (B, V)."""
    return emn_forward_batched(story[None], query[None], prep, V=V, G=G)[0]


def emn_reference(story, query, params):
    """Pure-JAX mirror of the PyTorch forward, for correctness checking."""
    a_embed = params["embedA"][story].sum(axis=2)          # (B, S, d)
    u = params["embedB"][query].sum(axis=1)                # (B, d)
    inner = jnp.einsum("ijk,ik->j", a_embed, u)            # (S,) — shared across batch
    p = jax.nn.softmax(inner, axis=-1)
    c_embed = params["embedC"][story].sum(axis=2)          # (B, S, d)
    o = jnp.einsum("ijk,j->ik", c_embed, p)                # (B, d)
    ten3 = o + u
    return jax.nn.relu(ten3 @ params["W"].T + params["b"])


if __name__ == "__main__":
    V, d = 32, 20            # vocab size, embedding dim (d=20 as in the module)
    B, S, W, Q = 2, 8, 6, 5  # batch, sentences, words/sentence, query length
    N = 16                   # independent (story, query) problems batched per launch

    key = jax.random.PRNGKey(0)
    k_ea, k_eb, k_ec, k_w, k_b, k_story, k_query = jax.random.split(key, 7)

    bound = 1.0 / jnp.sqrt(jnp.float32(d))
    params = {
        # nn.Embedding default init: N(0, 1)
        "embedA": jax.random.normal(k_ea, (V, d), dtype=jnp.float32),
        "embedB": jax.random.normal(k_eb, (V, d), dtype=jnp.float32),
        "embedC": jax.random.normal(k_ec, (V, d), dtype=jnp.float32),
        # nn.Linear default init: U(-1/sqrt(d), 1/sqrt(d))
        "W": jax.random.uniform(k_w, (V, d), jnp.float32, -bound, bound),
        "b": jax.random.uniform(k_b, (V,), jnp.float32, -bound, bound),
    }

    stories = jax.random.randint(k_story, (N, B, S, W), 0, V, dtype=jnp.int32)
    queries = jax.random.randint(k_query, (N, B, Q), 0, V, dtype=jnp.int32)

    prep = prepare_params(params)            # one-time packing, outside the per-call path

    out = jax.block_until_ready(emn_forward_batched(stories, queries, prep, V=V, G=8))
    assert out.shape == (N, B, V)

    for n in range(N):
        ref = emn_reference(stories[n], queries[n], params)
        assert jnp.allclose(out[n], ref, atol=1e-4, rtol=1e-4), \
            f"Pallas kernel mismatch vs reference at problem {n}"

    # single-problem path (padded up to one grid step) stays correct too
    out1 = jax.block_until_ready(emn_forward(stories[0], queries[0], prep, V=V))
    ref1 = emn_reference(stories[0], queries[0], params)
    assert jnp.allclose(out1, ref1, atol=1e-4, rtol=1e-4), "single-problem path mismatch"

    print("KERNEL_OK")
</pallas_src>

<mosaic_0001>
module attributes {stable_mosaic.version = 11 : i64} {
  func.func @emn_kernel(%arg0: i32, %arg1: memref<128x11xi32, #tpu.memory_space<vmem>>, %arg2: memref<64x384xf32, #tpu.memory_space<vmem>>, %arg3: memref<128x128xf32, #tpu.memory_space<vmem>>, %arg4: memref<1x128xf32, #tpu.memory_space<vmem>>, %arg5: memref<128x8xf32, #tpu.memory_space<vmem>>, %arg6: memref<8x128xf32, #tpu.memory_space<vmem>>, %arg7: memref<128x8xf32, #tpu.memory_space<vmem>>, %arg8: memref<64x128xf32, #tpu.memory_space<vmem>>, %arg9: memref<64x128xf32, #tpu.memory_space<vmem>>) attributes {dimension_semantics = [#tpu.dimension_semantics<parallel>], iteration_bounds = array<i64: 2>, scalar_prefetch = 0 : i64, scratch_operands = 0 : i64, tpu.core_type = #tpu.core_type<tc>, window_params = [{transform_indices = @transform_0, window_bounds = array<i64: 128, 11>}, {pipeline_mode = #tpu.pipeline_mode<synchronous>, transform_indices = @transform_1, window_bounds = array<i64: 64, 384>}, {pipeline_mode = #tpu.pipeline_mode<synchronous>, transform_indices = @transform_2, window_bounds = array<i64: 128, 128>}, {pipeline_mode = #tpu.pipeline_mode<synchronous>, transform_indices = @transform_3, window_bounds = array<i64: 1, 128>}, {pipeline_mode = #tpu.pipeline_mode<synchronous>, transform_indices = @transform_4, window_bounds = array<i64: 128, 8>}, {pipeline_mode = #tpu.pipeline_mode<synchronous>, transform_indices = @transform_5, window_bounds = array<i64: 8, 128>}, {pipeline_mode = #tpu.pipeline_mode<synchronous>, transform_indices = @transform_6, window_bounds = array<i64: 128, 8>}, {pipeline_mode = #tpu.pipeline_mode<synchronous>, transform_indices = @transform_7, window_bounds = array<i64: 64, 128>}, {transform_indices = @transform_8, window_bounds = array<i64: 64, 128>}]} {
    %c0 = arith.constant 0 : index
    %c0_0 = arith.constant 0 : index
    %0 = vector.load %arg1[%c0, %c0_0] : memref<128x11xi32, #tpu.memory_space<vmem>>, vector<128x11xi32>
    %1 = tpu.iota {dimensions = array<i32: 1>} : vector<128x64xi32>
    %cst = arith.constant 0.000000e+00 : f32
    %2 = vector.broadcast %cst : f32 to vector<128x64xf32>
    %3 = vector.extract_strided_slice %0 {offsets = [0, 0], sizes = [128, 1], strides = [1, 1]} : vector<128x11xi32> to vector<128x1xi32>
    %4 = vector.broadcast %3 : vector<128x1xi32> to vector<128x64xi32>
    %5 = arith.cmpi eq, %4, %1 : vector<128x64xi32>
    %6 = arith.extui %5 : vector<128x64xi1> to vector<128x64xi32>
    %7 = arith.sitofp %6 : vector<128x64xi32> to vector<128x64xf32>
    %8 = arith.addf %2, %7 : vector<128x64xf32>
    %9 = vector.extract_strided_slice %0 {offsets = [0, 1], sizes = [128, 1], strides = [1, 1]} : vector<128x11xi32> to vector<128x1xi32>
    %10 = vector.broadcast %9 : vector<128x1xi32> to vector<128x64xi32>
    %11 = arith.cmpi eq, %10, %1 : vector<128x64xi32>
    %12 = arith.extui %11 : vector<128x64xi1> to vector<128x64xi32>
    %13 = arith.sitofp %12 : vector<128x64xi32> to vector<128x64xf32>
    %14 = arith.addf %8, %13 : vector<128x64xf32>
    %15 = vector.extract_strided_slice %0 {offsets = [0, 2], sizes = [128, 1], strides = [1, 1]} : vector<128x11xi32> to vector<128x1xi32>
    %16 = vector.broadcast %15 : vector<128x1xi32> to vector<128x64xi32>
    %17 = arith.cmpi eq, %16, %1 : vector<128x64xi32>
    %18 = arith.extui %17 : vector<128x64xi1> to vector<128x64xi32>
    %19 = arith.sitofp %18 : vector<128x64xi32> to vector<128x64xf32>
    %20 = arith.addf %14, %19 : vector<128x64xf32>
    %21 = vector.extract_strided_slice %0 {offsets = [0, 3], sizes = [128, 1], strides = [1, 1]} : vector<128x11xi32> to vector<128x1xi32>
    %22 = vector.broadcast %21 : vector<128x1xi32> to vector<128x64xi32>
    %23 = arith.cmpi eq, %22, %1 : vector<128x64xi32>
    %24 = arith.extui %23 : vector<128x64xi1> to vector<128x64xi32>
    %25 = arith.sitofp %24 : vector<128x64xi32> to vector<128x64xf32>
    %26 = arith.addf %20, %25 : vector<128x64xf32>
    %27 = vector.extract_strided_slice %0 {offsets = [0, 4], sizes = [128, 1], strides = [1, 1]} : vector<128x11xi32> to vector<128x1xi32>
    %28 = vector.broadcast %27 : vector<128x1xi32> to vector<128x64xi32>
    %29 = arith.cmpi eq, %28, %1 : vector<128x64xi32>
    %30 = arith.extui %29 : vector<128x64xi1> to vector<128x64xi32>
    %31 = arith.sitofp %30 : vector<128x64xi32> to vector<128x64xf32>
    %32 = arith.addf %26, %31 : vector<128x64xf32>
    %33 = vector.extract_strided_slice %0 {offsets = [0, 5], sizes = [128, 1], strides = [1, 1]} : vector<128x11xi32> to vector<128x1xi32>
    %34 = vector.broadcast %33 : vector<128x1xi32> to vector<128x64xi32>
    %35 = arith.cmpi eq, %34, %1 : vector<128x64xi32>
    %36 = arith.extui %35 : vector<128x64xi1> to vector<128x64xi32>
    %37 = arith.sitofp %36 : vector<128x64xi32> to vector<128x64xf32>
    %38 = arith.addf %32, %37 : vector<128x64xf32>
    %39 = vector.extract_strided_slice %0 {offsets = [0, 6], sizes = [128, 1], strides = [1, 1]} : vector<128x11xi32> to vector<128x1xi32>
    %40 = vector.broadcast %39 : vector<128x1xi32> to vector<128x64xi32>
    %41 = arith.cmpi eq, %40, %1 : vector<128x64xi32>
    %42 = arith.extui %41 : vector<128x64xi1> to vector<128x64xi32>
    %43 = arith.sitofp %42 : vector<128x64xi32> to vector<128x64xf32>
    %44 = arith.addf %38, %43 : vector<128x64xf32>
    %45 = vector.extract_strided_slice %0 {offsets = [0, 7], sizes = [128, 1], strides = [1, 1]} : vector<128x11xi32> to vector<128x1xi32>
    %46 = vector.broadcast %45 : vector<128x1xi32> to vector<128x64xi32>
    %47 = arith.cmpi eq, %46, %1 : vector<128x64xi32>
    %48 = arith.extui %47 : vector<128x64xi1> to vector<128x64xi32>
    %49 = arith.sitofp %48 : vector<128x64xi32> to vector<128x64xf32>
    %50 = arith.addf %44, %49 : vector<128x64xf32>
    %51 = vector.extract_strided_slice %0 {offsets = [0, 8], sizes = [128, 1], strides = [1, 1]} : vector<128x11xi32> to vector<128x1xi32>
    %52 = vector.broadcast %51 : vector<128x1xi32> to vector<128x64xi32>
    %53 = arith.cmpi eq, %52, %1 : vector<128x64xi32>
    %54 = arith.extui %53 : vector<128x64xi1> to vector<128x64xi32>
    %55 = arith.sitofp %54 : vector<128x64xi32> to vector<128x64xf32>
    %56 = arith.addf %50, %55 : vector<128x64xf32>
    %57 = vector.extract_strided_slice %0 {offsets = [0, 9], sizes = [128, 1], strides = [1, 1]} : vector<128x11xi32> to vector<128x1xi32>
    %58 = vector.broadcast %57 : vector<128x1xi32> to vector<128x64xi32>
    %59 = arith.cmpi eq, %58, %1 : vector<128x64xi32>
    %60 = arith.extui %59 : vector<128x64xi1> to vector<128x64xi32>
    %61 = arith.sitofp %60 : vector<128x64xi32> to vector<128x64xf32>
    %62 = arith.addf %56, %61 : vector<128x64xf32>
    %63 = vector.extract_strided_slice %0 {offsets = [0, 10], sizes = [128, 1], strides = [1, 1]} : vector<128x11xi32> to vector<128x1xi32>
    %64 = vector.broadcast %63 : vector<128x1xi32> to vector<128x64xi32>
    %65 = arith.cmpi eq, %64, %1 : vector<128x64xi32>
    %66 = arith.extui %65 : vector<128x64xi1> to vector<128x64xi32>
    %67 = arith.sitofp %66 : vector<128x64xi32> to vector<128x64xf32>
    %68 = arith.addf %62, %67 : vector<128x64xf32>
    %c0_1 = arith.constant 0 : index
    %c0_2 = arith.constant 0 : index
    %69 = vector.load %arg2[%c0_1, %c0_2] : memref<64x384xf32, #tpu.memory_space<vmem>>, vector<64x384xf32>
    %cst_3 = arith.constant dense<0.000000e+00> : vector<128x384xf32>
    %70 = tpu.matmul %68, %69, %cst_3 {dimension_numbers = #tpu.dot_dimension_numbers<[1], [0], [0], [1], [0, 0, 1, 1], [], []>} : vector<128x64xf32>, vector<64x384xf32>, vector<128x384xf32> -> vector<128x384xf32>
    %71 = vector.extract_strided_slice %70 {offsets = [0, 0], sizes = [128, 128], strides = [1, 1]} : vector<128x384xf32> to vector<128x128xf32>
    %72 = vector.extract_strided_slice %70 {offsets = [0, 128], sizes = [128, 128], strides = [1, 1]} : vector<128x384xf32> to vector<128x128xf32>
    %73 = vector.extract_strided_slice %70 {offsets = [0, 256], sizes = [128, 128], strides = [1, 1]} : vector<128x384xf32> to vector<128x128xf32>
    %c0_4 = arith.constant 0 : index
    %c0_5 = arith.constant 0 : index
    %74 = vector.load %arg5[%c0_4, %c0_5] : memref<128x8xf32, #tpu.memory_space<vmem>>, vector<128x8xf32>
    %75 = arith.mulf %71, %72 : vector<128x128xf32>
    %cst_6 = arith.constant dense<0.000000e+00> : vector<128xf32>
    %76 = vector.multi_reduction <add>, %75, %cst_6 [1] : vector<128x128xf32> to vector<128xf32>
    %77 = vector.shape_cast %76 : vector<128xf32> to vector<128x1xf32>
    %c0_7 = arith.constant 0 : index
    %c0_8 = arith.constant 0 : index
    %78 = vector.load %arg6[%c0_7, %c0_8] : memref<8x128xf32, #tpu.memory_space<vmem>>, vector<8x128xf32>
    %79 = vector.broadcast %77 : vector<128x1xf32> to vector<128x8xf32>
    %80 = arith.mulf %79, %74 : vector<128x8xf32>
    %cst_9 = arith.constant dense<0.000000e+00> : vector<8x8xf32>
    %81 = tpu.matmul %78, %80, %cst_9 {dimension_numbers = #tpu.dot_dimension_numbers<[1], [0], [0], [1], [0, 0, 1, 1], [], []>} : vector<8x128xf32>, vector<128x8xf32>, vector<8x8xf32> -> vector<8x8xf32>
    %cst_10 = arith.constant dense<0xFF800000> : vector<8xf32>
    %82 = vector.multi_reduction <maximumf>, %81, %cst_10 [1] : vector<8x8xf32> to vector<8xf32>
    %83 = vector.shape_cast %82 : vector<8xf32> to vector<8x1xf32>
    %84 = vector.broadcast %83 : vector<8x1xf32> to vector<8x8xf32>
    %85 = arith.subf %81, %84 : vector<8x8xf32>
    %86 = math.exp %85 : vector<8x8xf32>
    %cst_11 = arith.constant dense<0.000000e+00> : vector<8xf32>
    %87 = vector.multi_reduction <add>, %86, %cst_11 [1] : vector<8x8xf32> to vector<8xf32>
    %88 = vector.shape_cast %87 : vector<8xf32> to vector<8x1xf32>
    %89 = tpu.reciprocal %88 {approx = true} : vector<8x1xf32> -> vector<8x1xf32>
    %90 = arith.mulf %88, %89 : vector<8x1xf32>
    %cst_12 = arith.constant 2.000000e+00 : f32
    %91 = vector.broadcast %cst_12 : f32 to vector<8x1xf32>
    %92 = arith.subf %91, %90 : vector<8x1xf32>
    %93 = arith.mulf %89, %92 : vector<8x1xf32>
    %94 = vector.broadcast %93 : vector<8x1xf32> to vector<8x8xf32>
    %95 = arith.mulf %86, %94 : vector<8x8xf32>
    %c0_13 = arith.constant 0 : index
    %c0_14 = arith.constant 0 : index
    %96 = vector.load %arg7[%c0_13, %c0_14] : memref<128x8xf32, #tpu.memory_space<vmem>>, vector<128x8xf32>
    %cst_15 = arith.constant dense<0.000000e+00> : vector<128x8xf32>
    %97 = tpu.matmul %96, %95, %cst_15 {dimension_numbers = #tpu.dot_dimension_numbers<[1], [0], [0], [1], [0, 0, 1, 1], [], []>} : vector<128x8xf32>, vector<8x8xf32>, vector<128x8xf32> -> vector<128x8xf32>
    %98 = arith.mulf %97, %74 : vector<128x8xf32>
    %cst_16 = arith.constant dense<0.000000e+00> : vector<128xf32>
    %99 = vector.multi_reduction <add>, %98, %cst_16 [1] : vector<128x8xf32> to vector<128xf32>
    %100 = vector.shape_cast %99 : vector<128xf32> to vector<128x1xf32>
    %101 = vector.broadcast %100 : vector<128x1xf32> to vector<128x128xf32>
    %102 = arith.mulf %73, %101 : vector<128x128xf32>
    %cst_17 = arith.constant 1.250000e-01 : f32
    %103 = vector.broadcast %cst_17 : f32 to vector<128x128xf32>
    %104 = arith.mulf %72, %103 : vector<128x128xf32>
    %105 = arith.addf %102, %104 : vector<128x128xf32>
    %c0_18 = arith.constant 0 : index
    %c0_19 = arith.constant 0 : index
    %106 = vector.load %arg8[%c0_18, %c0_19] : memref<64x128xf32, #tpu.memory_space<vmem>>, vector<64x128xf32>
    %cst_20 = arith.constant dense<0.000000e+00> : vector<64x128xf32>
    %107 = tpu.matmul %106, %105, %cst_20 {dimension_numbers = #tpu.dot_dimension_numbers<[1], [0], [0], [1], [0, 0, 1, 1], [], []>} : vector<64x128xf32>, vector<128x128xf32>, vector<64x128xf32> -> vector<64x128xf32>
    %c0_21 = arith.constant 0 : index
    %c0_22 = arith.constant 0 : index
    %108 = vector.load %arg3[%c0_21, %c0_22] : memref<128x128xf32, #tpu.memory_space<vmem>>, vector<128x128xf32>
    %cst_23 = arith.constant dense<0.000000e+00> : vector<64x128xf32>
    %109 = tpu.matmul %107, %108, %cst_23 {dimension_numbers = #tpu.dot_dimension_numbers<[1], [0], [0], [1], [0, 0, 1, 1], [], []>} : vector<64x128xf32>, vector<128x128xf32>, vector<64x128xf32> -> vector<64x128xf32>
    %c0_24 = arith.constant 0 : index
    %c0_25 = arith.constant 0 : index
    %110 = vector.load %arg4[%c0_24, %c0_25] : memref<1x128xf32, #tpu.memory_space<vmem>>, vector<1x128xf32>
    %111 = vector.broadcast %110 : vector<1x128xf32> to vector<64x128xf32>
    %112 = arith.addf %109, %111 : vector<64x128xf32>
    %cst_26 = arith.constant 0.000000e+00 : f32
    %113 = vector.broadcast %cst_26 : f32 to vector<64x128xf32>
    %114 = arith.maximumf %112, %113 : vector<64x128xf32>
    %c0_27 = arith.constant 0 : index
    %c0_28 = arith.constant 0 : index
    %115 = vector.load %arg9[%c0_27, %c0_28] : memref<64x128xf32, #tpu.memory_space<vmem>>, vector<64x128xf32>
    tpu.vector_store %arg9[%c0_27, %c0_28], %114 {strides = array<i32>} : memref<64x128xf32, #tpu.memory_space<vmem>>, vector<64x128xf32>,
    return
  }
  func.func @transform_0(%arg0: i32) -> (i32, i32) {
    %c0_i32 = arith.constant 0 : i32
    %c0_i32_0 = arith.constant 0 : i32
    return %arg0, %c0_i32 : i32, i32
  }
  func.func @transform_1(%arg0: i32) -> (i32, i32) {
    %c0_i32 = arith.constant 0 : i32
    %c0_i32_0 = arith.constant 0 : i32
    %c0_i32_1 = arith.constant 0 : i32
    return %c0_i32, %c0_i32_0 : i32, i32
  }
  func.func @transform_2(%arg0: i32) -> (i32, i32) {
    %c0_i32 = arith.constant 0 : i32
    %c0_i32_0 = arith.constant 0 : i32
    %c0_i32_1 = arith.constant 0 : i32
    return %c0_i32, %c0_i32_0 : i32, i32
  }
  func.func @transform_3(%arg0: i32) -> (i32, i32) {
    %c0_i32 = arith.constant 0 : i32
    %c0_i32_0 = arith.constant 0 : i32
    %c0_i32_1 = arith.constant 0 : i32
    return %c0_i32, %c0_i32_0 : i32, i32
  }
  func.func @transform_4(%arg0: i32) -> (i32, i32) {
    %c0_i32 = arith.constant 0 : i32
    %c0_i32_0 = arith.constant 0 : i32
    %c0_i32_1 = arith.constant 0 : i32
    return %c0_i32, %c0_i32_0 : i32, i32
  }
  func.func @transform_5(%arg0: i32) -> (i32, i32) {
    %c0_i32 = arith.constant 0 : i32
    %c0_i32_0 = arith.constant 0 : i32
    %c0_i32_1 = arith.constant 0 : i32
    return %c0_i32, %c0_i32_0 : i32, i32
  }
  func.func @transform_6(%arg0: i32) -> (i32, i32) {
    %c0_i32 = arith.constant 0 : i32
    %c0_i32_0 = arith.constant 0 : i32
    %c0_i32_1 = arith.constant 0 : i32
    return %c0_i32, %c0_i32_0 : i32, i32
  }
  func.func @transform_7(%arg0: i32) -> (i32, i32) {
    %c0_i32 = arith.constant 0 : i32
    %c0_i32_0 = arith.constant 0 : i32
    %c0_i32_1 = arith.constant 0 : i32
    return %c0_i32, %c0_i32_0 : i32, i32
  }
  func.func @transform_8(%arg0: i32) -> (i32, i32) {
    %c0_i32 = arith.constant 0 : i32
    %c0_i32_0 = arith.constant 0 : i32
    return %arg0, %c0_i32 : i32, i32
  }
}

</mosaic_0001>

<llo_original>
// kernel: emn_forward_batched.1
$region0: #{emn_forward_batched.1}
  #allocation0 [shape = 'u32[]', space=smem, size = 0x4, offset = 0x4, fixed_abs, tag = 'smem constant byte address 0x4 - core index']
  #allocation1 [shape = 'u32[144,128]{1,0:T(1,128)}', space=vmem, size = 0x12000, scoped, tag = 'internal scratch']
  %s0 = inlined_call_operand.vmem [shape: s32[256,11], index: 0, kind: input, shape index: {}]
  %s1 = inlined_call_operand.vmem [shape: f32[64,384], index: 1, kind: input, shape index: {}]
  %s2 = inlined_call_operand.vmem [shape: f32[128,128], index: 2, kind: input, shape index: {}]
  %s3 = inlined_call_operand.vmem [shape: f32[1,128], index: 3, kind: input, shape index: {}]
  %s4 = inlined_call_operand.vmem [shape: f32[128,8], index: 4, kind: input, shape index: {}]
  %s5 = inlined_call_operand.vmem [shape: f32[8,128], index: 5, kind: input, shape index: {}]
  %s6 = inlined_call_operand.vmem [shape: f32[128,8], index: 6, kind: input, shape index: {}]
  %s7 = inlined_call_operand.vmem [shape: f32[64,128], index: 7, kind: input, shape index: {}]
  %s8 = inlined_call_operand.vmem [shape: f32[128,128], index: 8, kind: output, shape index: {}]
  %s9 = sld [smem:[#allocation0]]
  $region65: #{emn_forward_batched.1} parent=0
    _
  %s11 = ssub.s32 1, %s9
  %s12 = scalar_select 0, %s11, %s9
  loop: start=0, step=1, limit=4
  $region2: #{emn_forward_batched.1} parent=0 // loop_pre_header
    _
  $region3: #{emn_forward_batched.1} parent=0 // loop_header
    %s14 = sphi 0, %s18
    %p15 = scmp.ge.s32.totalorder %s14, 4
    %s24 = sphi 0, %s26
    %s27 = sphi 0, %s24
    %s28 = sphi 0, %s27
    %s44 = sphi 0, %s28
    %s48 = sphi 0, %s48
    %s50 = sphi 0, %s48
    %s51 = sphi 0, %s50
    %s65 = sphi 0, %s51
    %s69 = sphi 0, %s69
    %s71 = sphi 0, %s69
    %s72 = sphi 0, %s71
    %s86 = sphi 0, %s72
    %s90 = sphi 0, %s90
    %s92 = sphi 0, %s90
    %s93 = sphi 0, %s92
    %s107 = sphi 0, %s93
    %s111 = sphi 0, %s111
    %s113 = sphi 0, %s111
    %s114 = sphi 0, %s113
    %s128 = sphi 0, %s114
    %s132 = sphi 0, %s132
    %s134 = sphi 0, %s132
    %s135 = sphi 0, %s134
    %s149 = sphi 0, %s135
    %s153 = sphi 0, %s153
    %s155 = sphi 0, %s153
    %s156 = sphi 0, %s155
    %s170 = sphi 0, %s156
    %s174 = sphi 0, %s174
    %s176 = sphi 0, %s174
    %s177 = sphi 0, %s176
    %s191 = sphi 0, %s177
    %s197 = sphi 0, %s199
    %s200 = sphi 0, %s197
    %s201 = sphi 0, %s200
    %s217 = sphi 0, %s201
  $region4: #{emn_forward_batched.1} parent=0 // loop_header_branch
    %17 = sbr.rel (%p15) target = $region8
  $region5: #{emn_forward_batched.1} parent=0 // loop_body
    %s19 = ssub.s32 %s14, 1
    %s20 = ssub.s32 %s14, 2
    %s21 = sadd.s32 %s14, 1
    %s22 = ssub.s32 %s14, %s21
    %p23 = scmp.eq.s32.totalorder %s22, 0
    %s25 = sadd.s32 %s24, 1
    %s26 = scalar_select %p23, %s24, %s25
    %p29 = pneg %p23
    %p30 = scmp.eq.s32.totalorder %s14, 1
    %p31 = por %p29, %p30
    %p32 = scmp.ne.s32.totalorder %s24, %s27
    %p33 = scmp.eq.s32.totalorder %s14, 0
    %p34 = por %p32, %p33
    %p35 = scmp.ne.s32.totalorder %s24, %s27
    %p36 = scmp.eq.s32.totalorder %s19, 1
    %p37 = por %p35, %p36
    %p38 = scmp.ne.s32.totalorder %s27, %s28
    %p39 = scmp.eq.s32.totalorder %s19, 0
    %p40 = por %p38, %p39
    %p41 = scmp.ne.s32.totalorder %s27, %s28
    %p42 = scmp.eq.s32.totalorder %s20, 1
    %p43 = por %p41, %p42
    %p45 = scmp.ne.s32.totalorder %s28, %s44
    %p46 = scmp.eq.s32.totalorder %s20, 0
    %p47 = por %p45, %p46
    %s49 = sadd.s32 %s48, 1
    %p52 = scmp.eq.s32.totalorder %s14, 1
    %p53 = scmp.ne.s32.totalorder %s48, %s50
    %p54 = scmp.eq.s32.totalorder %s14, 0
    %p55 = por %p53, %p54
    %p56 = scmp.ne.s32.totalorder %s48, %s50
    %p57 = scmp.eq.s32.totalorder %s19, 1
    %p58 = por %p56, %p57
    %p59 = scmp.ne.s32.totalorder %s50, %s51
    %p60 = scmp.eq.s32.totalorder %s19, 0
    %p61 = por %p59, %p60
    %p62 = scmp.ne.s32.totalorder %s50, %s51
    %p63 = scmp.eq.s32.totalorder %s20, 1
    %p64 = por %p62, %p63
    %p66 = scmp.ne.s32.totalorder %s51, %s65
    %p67 = scmp.eq.s32.totalorder %s20, 0
    %p68 = por %p66, %p67
    %s70 = sadd.s32 %s69, 1
    %p73 = scmp.eq.s32.totalorder %s14, 1
    %p74 = scmp.ne.s32.totalorder %s69, %s71
    %p75 = scmp.eq.s32.totalorder %s14, 0
    %p76 = por %p74, %p75
    %p77 = scmp.ne.s32.totalorder %s69, %s71
    %p78 = scmp.eq.s32.totalorder %s19, 1
    %p79 = por %p77, %p78
    %p80 = scmp.ne.s32.totalorder %s71, %s72
    %p81 = scmp.eq.s32.totalorder %s19, 0
    %p82 = por %p80, %p81
    %p83 = scmp.ne.s32.totalorder %s71, %s72
    %p84 = scmp.eq.s32.totalorder %s20, 1
    %p85 = por %p83, %p84
    %p87 = scmp.ne.s32.totalorder %s72, %s86
    %p88 = scmp.eq.s32.totalorder %s20, 0
    %p89 = por %p87, %p88
    %s91 = sadd.s32 %s90, 1
    %p94 = scmp.eq.s32.totalorder %s14, 1
    %p95 = scmp.ne.s32.totalorder %s90, %s92
    %p96 = scmp.eq.s32.totalorder %s14, 0
    %p97 = por %p95, %p96
    %p98 = scmp.ne.s32.totalorder %s90, %s92
    %p99 = scmp.eq.s32.totalorder %s19, 1
    %p100 = por %p98, %p99
    %p101 = scmp.ne.s32.totalorder %s92, %s93
    %p102 = scmp.eq.s32.totalorder %s19, 0
    %p103 = por %p101, %p102
    %p104 = scmp.ne.s32.totalorder %s92, %s93
    %p105 = scmp.eq.s32.totalorder %s20, 1
    %p106 = por %p104, %p105
    %p108 = scmp.ne.s32.totalorder %s93, %s107
    %p109 = scmp.eq.s32.totalorder %s20, 0
    %p110 = por %p108, %p109
    %s112 = sadd.s32 %s111, 1
    %p115 = scmp.eq.s32.totalorder %s14, 1
    %p116 = scmp.ne.s32.totalorder %s111, %s113
    %p117 = scmp.eq.s32.totalorder %s14, 0
    %p118 = por %p116, %p117
    %p119 = scmp.ne.s32.totalorder %s111, %s113
    %p120 = scmp.eq.s32.totalorder %s19, 1
    %p121 = por %p119, %p120
    %p122 = scmp.ne.s32.totalorder %s113, %s114
    %p123 = scmp.eq.s32.totalorder %s19, 0
    %p124 = por %p122, %p123
    %p125 = scmp.ne.s32.totalorder %s113, %s114
    %p126 = scmp.eq.s32.totalorder %s20, 1
    %p127 = por %p125, %p126
    %p129 = scmp.ne.s32.totalorder %s114, %s128
    %p130 = scmp.eq.s32.totalorder %s20, 0
    %p131 = por %p129, %p130
    %s133 = sadd.s32 %s132, 1
    %p136 = scmp.eq.s32.totalorder %s14, 1
    %p137 = scmp.ne.s32.totalorder %s132, %s134
    %p138 = scmp.eq.s32.totalorder %s14, 0
    %p139 = por %p137, %p138
    %p140 = scmp.ne.s32.totalorder %s132, %s134
    %p141 = scmp.eq.s32.totalorder %s19, 1
    %p142 = por %p140, %p141
    %p143 = scmp.ne.s32.totalorder %s134, %s135
    %p144 = scmp.eq.s32.totalorder %s19, 0
    %p145 = por %p143, %p144
    %p146 = scmp.ne.s32.totalorder %s134, %s135
    %p147 = scmp.eq.s32.totalorder %s20, 1
    %p148 = por %p146, %p147
    %p150 = scmp.ne.s32.totalorder %s135, %s149
    %p151 = scmp.eq.s32.totalorder %s20, 0
    %p152 = por %p150, %p151
    %s154 = sadd.s32 %s153, 1
    %p157 = scmp.eq.s32.totalorder %s14, 1
    %p158 = scmp.ne.s32.totalorder %s153, %s155
    %p159 = scmp.eq.s32.totalorder %s14, 0
    %p160 = por %p158, %p159
    %p161 = scmp.ne.s32.totalorder %s153, %s155
    %p162 = scmp.eq.s32.totalorder %s19, 1
    %p163 = por %p161, %p162
    %p164 = scmp.ne.s32.totalorder %s155, %s156
    %p165 = scmp.eq.s32.totalorder %s19, 0
    %p166 = por %p164, %p165
    %p167 = scmp.ne.s32.totalorder %s155, %s156
    %p168 = scmp.eq.s32.totalorder %s20, 1
    %p169 = por %p167, %p168
    %p171 = scmp.ne.s32.totalorder %s156, %s170
    %p172 = scmp.eq.s32.totalorder %s20, 0
    %p173 = por %p171, %p172
    %s175 = sadd.s32 %s174, 1
    %p178 = scmp.eq.s32.totalorder %s14, 1
    %p179 = scmp.ne.s32.totalorder %s174, %s176
    %p180 = scmp.eq.s32.totalorder %s14, 0
    %p181 = por %p179, %p180
    %p182 = scmp.ne.s32.totalorder %s174, %s176
    %p183 = scmp.eq.s32.totalorder %s19, 1
    %p184 = por %p182, %p183
    %p185 = scmp.ne.s32.totalorder %s176, %s177
    %p186 = scmp.eq.s32.totalorder %s19, 0
    %p187 = por %p185, %p186
    %p188 = scmp.ne.s32.totalorder %s176, %s177
    %p189 = scmp.eq.s32.totalorder %s20, 1
    %p190 = por %p188, %p189
    %p192 = scmp.ne.s32.totalorder %s177, %s191
    %p193 = scmp.eq.s32.totalorder %s20, 0
    %p194 = por %p192, %p193
    %s195 = ssub.s32 %s14, %s21
    %p196 = scmp.eq.s32.totalorder %s195, 0
    %s198 = sadd.s32 %s197, 1
    %s199 = scalar_select %p196, %s197, %s198
    %p202 = pneg %p196
    %p203 = scmp.eq.s32.totalorder %s14, 1
    %p204 = por %p202, %p203
    %p205 = scmp.ne.s32.totalorder %s197, %s200
    %p206 = scmp.eq.s32.totalorder %s14, 0
    %p207 = por %p205, %p206
    %p208 = scmp.ne.s32.totalorder %s197, %s200
    %p209 = scmp.eq.s32.totalorder %s19, 1
    %p210 = por %p208, %p209
    %p211 = scmp.ne.s32.totalorder %s200, %s201
    %p212 = scmp.eq.s32.totalorder %s19, 0
    %p213 = por %p211, %p212
    %p214 = scmp.ne.s32.totalorder %s200, %s201
    %p215 = scmp.eq.s32.totalorder %s20, 1
    %p216 = por %p214, %p215
    %p218 = scmp.ne.s32.totalorder %s201, %s217
    %p219 = scmp.eq.s32.totalorder %s20, 0
    %p220 = por %p218, %p219
    %p221 = scmp.le.s32.totalorder 1, %s14
    %p222 = scmp.lt.s32.totalorder %s14, 3
    %p223 = pnand %p221, %p222
    %p224 = pneg %p223
    // Predicated region
    $region9: #{emn_forward_batched.1} parent=5 // pred_check
      _
    $region10: #{emn_forward_batched.1} parent=5 // pred_check_branch
      %226 = sbr.rel (%p223) target = $region12
    $region11: #{emn_forward_batched.1} parent=5 // pred_region
      %s227 = ssub.s32 %s14, 1
      // Predicated region
      $region13: #{emn_forward_batched.1} parent=11 // pred_check
        %p228 = pneg %p61
      $region14: #{emn_forward_batched.1} parent=11 // pred_check_branch
        %230 = sbr.rel (%p228) target = $region16
      $region15: #{emn_forward_batched.1} parent=11 // pred_region
        _
      $region16: #{emn_forward_batched.1} parent=11 // pred_fallthru
        _
      // Predicated region
      $region17: #{emn_forward_batched.1} parent=11 // pred_check
        %p231 = pneg %p82
      $region18: #{emn_forward_batched.1} parent=11 // pred_check_branch
        %233 = sbr.rel (%p231) target = $region20
      $region19: #{emn_forward_batched.1} parent=11 // pred_region
        _
      $region20: #{emn_forward_batched.1} parent=11 // pred_fallthru
        _
      // Predicated region
      $region21: #{emn_forward_batched.1} parent=11 // pred_check
        %p234 = pneg %p103
      $region22: #{emn_forward_batched.1} parent=11 // pred_check_branch
        %236 = sbr.rel (%p234) target = $region24
      $region23: #{emn_forward_batched.1} parent=11 // pred_region
        _
      $region24: #{emn_forward_batched.1} parent=11 // pred_fallthru
        _
      // Predicated region
      $region25: #{emn_forward_batched.1} parent=11 // pred_check
        %p237 = pneg %p124
      $region26: #{emn_forward_batched.1} parent=11 // pred_check_branch
        %239 = sbr.rel (%p237) target = $region28
      $region27: #{emn_forward_batched.1} parent=11 // pred_region
        _
      $region28: #{emn_forward_batched.1} parent=11 // pred_fallthru
        _
      // Predicated region
      $region29: #{emn_forward_batched.1} parent=11 // pred_check
        %p240 = pneg %p145
      $region30: #{emn_forward_batched.1} parent=11 // pred_check_branch
        %242 = sbr.rel (%p240) target = $region32
      $region31: #{emn_forward_batched.1} parent=11 // pred_region
        _
      $region32: #{emn_forward_batched.1} parent=11 // pred_fallthru
        _
      // Predicated region
      $region33: #{emn_forward_batched.1} parent=11 // pred_check
        %p243 = pneg %p166
      $region34: #{emn_forward_batched.1} parent=11 // pred_check_branch
        %245 = sbr.rel (%p243) target = $region36
      $region35: #{emn_forward_batched.1} parent=11 // pred_region
        _
      $region36: #{emn_forward_batched.1} parent=11 // pred_fallthru
        _
      // Predicated region
      $region37: #{emn_forward_batched.1} parent=11 // pred_check
        %p246 = pneg %p187
      $region38: #{emn_forward_batched.1} parent=11 // pred_check_branch
        %248 = sbr.rel (%p246) target = $region40
      $region39: #{emn_forward_batched.1} parent=11 // pred_region
        _
      $region40: #{emn_forward_batched.1} parent=11 // pred_fallthru
        _
    $region12: #{emn_forward_batched.1} parent=5 // pred_fallthru
      _
    %p249 = scmp.lt.s32.totalorder %s14, 2
    // Predicated region
    $region41: #{emn_forward_batched.1} parent=5 // pred_check
      %p250 = pneg %p249
    $region42: #{emn_forward_batched.1} parent=5 // pred_check_branch
      %252 = sbr.rel (%p250) target = $region44
    $region43: #{emn_forward_batched.1} parent=5 // pred_region
      // Predicated region
      $region45: #{emn_forward_batched.1} parent=43 // pred_check
        %p253 = pneg %p34
      $region46: #{emn_forward_batched.1} parent=43 // pred_check_branch
        %255 = sbr.rel (%p253) target = $region48
      $region47: #{emn_forward_batched.1} parent=43 // pred_region
        %s256 = smul.u32 16, %s14
        %p257 = scmp.lt.s32.totalorder %s256, 31
        %s258 = scalar_select %p257, %s256, 31
        %s259 = smul.addr %s258, 8
        %s260 = scalar_lea.vmem %s0, %s259
        %s261 = smul.u32 16, %s14
      $region48: #{emn_forward_batched.1} parent=43 // pred_fallthru
        _
    $region44: #{emn_forward_batched.1} parent=5 // pred_fallthru
      _
    %p262 = scmp.le.s32.totalorder 1, %s14
    %p263 = scmp.lt.s32.totalorder %s14, 3
    %p264 = pnand %p262, %p263
    %p265 = pneg %p264
    // Predicated region
    $region49: #{emn_forward_batched.1} parent=5 // pred_check
      _
    $region50: #{emn_forward_batched.1} parent=5 // pred_check_branch
      %267 = sbr.rel (%p264) target = $region52
    $region51: #{emn_forward_batched.1} parent=5 // pred_region
      %s268 = ssub.s32 %s14, 1
      %s269 = smul.u32 16, %s19
      %p270 = scmp.lt.s32.totalorder %s269, 31
      %s271 = scalar_select %p270, %s269, 31
      %s272 = smul.addr %s271, 8
      %s273 = scalar_lea.vmem %s0, %s272
      %p274 = pneg %p40
      %p275 = pneg %p37
      %p276 = pneg %p61
      %p277 = pneg %p58
      %p278 = pneg %p82
      %p279 = pneg %p79
      %p280 = pneg %p103
      %p281 = pneg %p100
      %p282 = pneg %p124
      %p283 = pneg %p121
      %p284 = pneg %p145
      %p285 = pneg %p142
      %p286 = pneg %p166
      %p287 = pneg %p163
      %p288 = pneg %p187
      %p289 = pneg %p184
      %p290 = pneg %p213
      %p291 = pneg %p210
      %s292 = smul.u32 8, %s19
      %p293 = scmp.lt.s32.totalorder %s292, 15
      %s294 = scalar_select %p293, %s292, 15
      %s295 = smul.addr %s294, 8
      %s296 = scalar_lea.vmem %s8, %s295
      %s297 = smul.u32 16, %s19
      %p298 = scmp.lt.s32.totalorder %s297, 31
      %s299 = scalar_select %p298, %s297, 31
      %s300 = smul.addr %s299, 8
      %s301 = scalar_lea.vmem %s0, %s300
      %s302 = smul.u32 16, %s19
      %s303 = smul.u32 8, %s19
      %p304 = scmp.lt.s32.totalorder %s303, 15
      %s305 = scalar_select %p304, %s303, 15
      %s306 = smul.addr %s305, 8
      %s307 = scalar_lea.vmem %s8, %s306
      %s308 = smul.u32 8, %s19
      %v309 = vld [vmem:[%s301] sm:$0xff]
      %v310 = vld [vmem:[%s301 + $0x8] sm:$0xff]
      %v311 = vld [vmem:[%s301 + $0x10] sm:$0xff]
      %v312 = vld [vmem:[%s301 + $0x18] sm:$0xff]
      %v313 = vld [vmem:[%s301 + $0x20] sm:$0xff]
      %v314 = vld [vmem:[%s301 + $0x28] sm:$0xff]
      %v315 = vld [vmem:[%s301 + $0x30] sm:$0xff]
      %v316 = vld [vmem:[%s301 + $0x38] sm:$0xff]
      %v317 = vld [vmem:[%s301 + $0x40] sm:$0xff]
      %v318 = vld [vmem:[%s301 + $0x48] sm:$0xff]
      %v319 = vld [vmem:[%s301 + $0x50] sm:$0xff]
      %v320 = vld [vmem:[%s301 + $0x58] sm:$0xff]
      %v321 = vld [vmem:[%s301 + $0x60] sm:$0xff]
      %v322 = vld [vmem:[%s301 + $0x68] sm:$0xff]
      %v323 = vld [vmem:[%s301 + $0x70] sm:$0xff]
      %v324 = vld [vmem:[%s301 + $0x78] sm:$0xff]
      %v325 = vlaneseq
      %v326 = vand.u32 %v325, 127
      %327 = vset.pattern.permute.xlu0 0
      %328 = vperm.xlu0 %327, %v309
      %v329 = vpop.permute.xlu0 %328
      %330 = vset.pattern.permute.xlu0 0
      %331 = vperm.xlu0 %330, %v310
      %v332 = vpop.permute.xlu0 %331
      %333 = vset.pattern.permute.xlu0 0
      %334 = vperm.xlu0 %333, %v311
      %v335 = vpop.permute.xlu0 %334
      %336 = vset.pattern.permute.xlu0 0
      %337 = vperm.xlu0 %336, %v312
      %v338 = vpop.permute.xlu0 %337
      %339 = vset.pattern.permute.xlu0 0
      %340 = vperm.xlu0 %339, %v313
      %v341 = vpop.permute.xlu0 %340
      %342 = vset.pattern.permute.xlu0 0
      %343 = vperm.xlu0 %342, %v314
      %v344 = vpop.permute.xlu0 %343
      %345 = vset.pattern.permute.xlu0 0
      %346 = vperm.xlu0 %345, %v315
      %v347 = vpop.permute.xlu0 %346
      %348 = vset.pattern.permute.xlu0 0
      %349 = vperm.xlu0 %348, %v316
      %v350 = vpop.permute.xlu0 %349
      %351 = vset.pattern.permute.xlu0 0
      %352 = vperm.xlu0 %351, %v317
      %v353 = vpop.permute.xlu0 %352
      %354 = vset.pattern.permute.xlu0 0
      %355 = vperm.xlu0 %354, %v318
      %v356 = vpop.permute.xlu0 %355
      %357 = vset.pattern.permute.xlu0 0
      %358 = vperm.xlu0 %357, %v319
      %v359 = vpop.permute.xlu0 %358
      %360 = vset.pattern.permute.xlu0 0
      %361 = vperm.xlu0 %360, %v320
      %v362 = vpop.permute.xlu0 %361
      %363 = vset.pattern.permute.xlu0 0
      %364 = vperm.xlu0 %363, %v321
      %v365 = vpop.permute.xlu0 %364
      %366 = vset.pattern.permute.xlu0 0
      %367 = vperm.xlu0 %366, %v322
      %v368 = vpop.permute.xlu0 %367
      %369 = vset.pattern.permute.xlu0 0
      %370 = vperm.xlu0 %369, %v323
      %v371 = vpop.permute.xlu0 %370
      %372 = vset.pattern.permute.xlu0 0
      %373 = vperm.xlu0 %372, %v324
      %v374 = vpop.permute.xlu0 %373
      %vm375 = vcmp.eq.s32.totalorder %v329, %v326
      %vm376 = vcmp.eq.s32.totalorder %v332, %v326
      %vm377 = vcmp.eq.s32.totalorder %v335, %v326
      %vm378 = vcmp.eq.s32.totalorder %v338, %v326
      %vm379 = vcmp.eq.s32.totalorder %v341, %v326
      %vm380 = vcmp.eq.s32.totalorder %v344, %v326
      %vm381 = vcmp.eq.s32.totalorder %v347, %v326
      %vm382 = vcmp.eq.s32.totalorder %v350, %v326
      %vm383 = vcmp.eq.s32.totalorder %v353, %v326
      %vm384 = vcmp.eq.s32.totalorder %v356, %v326
      %vm385 = vcmp.eq.s32.totalorder %v359, %v326
      %vm386 = vcmp.eq.s32.totalorder %v362, %v326
      %vm387 = vcmp.eq.s32.totalorder %v365, %v326
      %vm388 = vcmp.eq.s32.totalorder %v368, %v326
      %vm389 = vcmp.eq.s32.totalorder %v371, %v326
      %vm390 = vcmp.eq.s32.totalorder %v374, %v326
      %v391 = vsel %vm375, 1, 0
      %v392 = vsel %vm376, 1, 0
      %v393 = vsel %vm377, 1, 0
      %v394 = vsel %vm378, 1, 0
      %v395 = vsel %vm379, 1, 0
      %v396 = vsel %vm380, 1, 0
      %v397 = vsel %vm381, 1, 0
      %v398 = vsel %vm382, 1, 0
      %v399 = vsel %vm383, 1, 0
      %v400 = vsel %vm384, 1, 0
      %v401 = vsel %vm385, 1, 0
      %v402 = vsel %vm386, 1, 0
      %v403 = vsel %vm387, 1, 0
      %v404 = vsel %vm388, 1, 0
      %v405 = vsel %vm389, 1, 0
      %v406 = vsel %vm390, 1, 0
      %v407 = vcvt.s32.f32 %v391
      %v408 = vcvt.s32.f32 %v392
      %v409 = vcvt.s32.f32 %v393
      %v410 = vcvt.s32.f32 %v394
      %v411 = vcvt.s32.f32 %v395
      %v412 = vcvt.s32.f32 %v396
      %v413 = vcvt.s32.f32 %v397
      %v414 = vcvt.s32.f32 %v398
      %v415 = vcvt.s32.f32 %v399
      %v416 = vcvt.s32.f32 %v400
      %v417 = vcvt.s32.f32 %v401
      %v418 = vcvt.s32.f32 %v402
      %v419 = vcvt.s32.f32 %v403
      %v420 = vcvt.s32.f32 %v404
      %v421 = vcvt.s32.f32 %v405
      %v422 = vcvt.s32.f32 %v406
      %v423 = vadd.f32 %v407, 0.0
      %v424 = vadd.f32 %v408, 0.0
      %v425 = vadd.f32 %v409, 0.0
      %v426 = vadd.f32 %v410, 0.0
      %v427 = vadd.f32 %v411, 0.0
      %v428 = vadd.f32 %v412, 0.0
      %v429 = vadd.f32 %v413, 0.0
      %v430 = vadd.f32 %v414, 0.0
      %v431 = vadd.f32 %v415, 0.0
      %v432 = vadd.f32 %v416, 0.0
      %v433 = vadd.f32 %v417, 0.0
      %v434 = vadd.f32 %v418, 0.0
      %v435 = vadd.f32 %v419, 0.0
      %v436 = vadd.f32 %v420, 0.0
      %v437 = vadd.f32 %v421, 0.0
      %v438 = vadd.f32 %v422, 0.0
      %439 = vset.pattern.permute.xlu0 1
      %440 = vperm.xlu0 %439, %v309
      %v441 = vpop.permute.xlu0 %440
      %442 = vset.pattern.permute.xlu0 1
      %443 = vperm.xlu0 %442, %v310
      %v444 = vpop.permute.xlu0 %443
      %445 = vset.pattern.permute.xlu0 1
      %446 = vperm.xlu0 %445, %v311
      %v447 = vpop.permute.xlu0 %446
      %448 = vset.pattern.permute.xlu0 1
      %449 = vperm.xlu0 %448, %v312
      %v450 = vpop.permute.xlu0 %449
      %451 = vset.pattern.permute.xlu0 1
      %452 = vperm.xlu0 %451, %v313
      %v453 = vpop.permute.xlu0 %452
      %454 = vset.pattern.permute.xlu0 1
      %455 = vperm.xlu0 %454, %v314
      %v456 = vpop.permute.xlu0 %455
      %457 = vset.pattern.permute.xlu0 1
      %458 = vperm.xlu0 %457, %v315
      %v459 = vpop.permute.xlu0 %458
      %460 = vset.pattern.permute.xlu0 1
      %461 = vperm.xlu0 %460, %v316
      %v462 = vpop.permute.xlu0 %461
      %463 = vset.pattern.permute.xlu0 1
      %464 = vperm.xlu0 %463, %v317
      %v465 = vpop.permute.xlu0 %464
      %466 = vset.pattern.permute.xlu0 1
      %467 = vperm.xlu0 %466, %v318
      %v468 = vpop.permute.xlu0 %467
      %469 = vset.pattern.permute.xlu0 1
      %470 = vperm.xlu0 %469, %v319
      %v471 = vpop.permute.xlu0 %470
      %472 = vset.pattern.permute.xlu0 1
      %473 = vperm.xlu0 %472, %v320
      %v474 = vpop.permute.xlu0 %473
      %475 = vset.pattern.permute.xlu0 1
      %476 = vperm.xlu0 %475, %v321
      %v477 = vpop.permute.xlu0 %476
      %478 = vset.pattern.permute.xlu0 1
      %479 = vperm.xlu0 %478, %v322
      %v480 = vpop.permute.xlu0 %479
      %481 = vset.pattern.permute.xlu0 1
      %482 = vperm.xlu0 %481, %v323
      %v483 = vpop.permute.xlu0 %482
      %484 = vset.pattern.permute.xlu0 1
      %485 = vperm.xlu0 %484, %v324
      %v486 = vpop.permute.xlu0 %485
      %vm487 = vcmp.eq.s32.totalorder %v441, %v326
      %vm488 = vcmp.eq.s32.totalorder %v444, %v326
      %vm489 = vcmp.eq.s32.totalorder %v447, %v326
      %vm490 = vcmp.eq.s32.totalorder %v450, %v326
      %vm491 = vcmp.eq.s32.totalorder %v453, %v326
      %vm492 = vcmp.eq.s32.totalorder %v456, %v326
      %vm493 = vcmp.eq.s32.totalorder %v459, %v326
      %vm494 = vcmp.eq.s32.totalorder %v462, %v326
      %vm495 = vcmp.eq.s32.totalorder %v465, %v326
      %vm496 = vcmp.eq.s32.totalorder %v468, %v326
      %vm497 = vcmp.eq.s32.totalorder %v471, %v326
      %vm498 = vcmp.eq.s32.totalorder %v474, %v326
      %vm499 = vcmp.eq.s32.totalorder %v477, %v326
      %vm500 = vcmp.eq.s32.totalorder %v480, %v326
      %vm501 = vcmp.eq.s32.totalorder %v483, %v326
      %vm502 = vcmp.eq.s32.totalorder %v486, %v326
      %v503 = vsel %vm487, 1, 0
      %v504 = vsel %vm488, 1, 0
      %v505 = vsel %vm489, 1, 0
      %v506 = vsel %vm490, 1, 0
      %v507 = vsel %vm491, 1, 0
      %v508 = vsel %vm492, 1, 0
      %v509 = vsel %vm493, 1, 0
      %v510 = vsel %vm494, 1, 0
      %v511 = vsel %vm495, 1, 0
      %v512 = vsel %vm496, 1, 0
      %v513 = vsel %vm497, 1, 0
      %v514 = vsel %vm498, 1, 0
      %v515 = vsel %vm499, 1, 0
      %v516 = vsel %vm500, 1, 0
      %v517 = vsel %vm501, 1, 0
      %v518 = vsel %vm502, 1, 0
      %v519 = vcvt.s32.f32 %v503
      %v520 = vcvt.s32.f32 %v504
      %v521 = vcvt.s32.f32 %v505
      %v522 = vcvt.s32.f32 %v506
      %v523 = vcvt.s32.f32 %v507
      %v524 = vcvt.s32.f32 %v508
      %v525 = vcvt.s32.f32 %v509
      %v526 = vcvt.s32.f32 %v510
      %v527 = vcvt.s32.f32 %v511
      %v528 = vcvt.s32.f32 %v512
      %v529 = vcvt.s32.f32 %v513
      %v530 = vcvt.s32.f32 %v514
      %v531 = vcvt.s32.f32 %v515
      %v532 = vcvt.s32.f32 %v516
      %v533 = vcvt.s32.f32 %v517
      %v534 = vcvt.s32.f32 %v518
      %v535 = vadd.f32 %v423, %v519
      %v536 = vadd.f32 %v424, %v520
      %v537 = vadd.f32 %v425, %v521
      %v538 = vadd.f32 %v426, %v522
      %v539 = vadd.f32 %v427, %v523
      %v540 = vadd.f32 %v428, %v524
      %v541 = vadd.f32 %v429, %v525
      %v542 = vadd.f32 %v430, %v526
      %v543 = vadd.f32 %v431, %v527
      %v544 = vadd.f32 %v432, %v528
      %v545 = vadd.f32 %v433, %v529
      %v546 = vadd.f32 %v434, %v530
      %v547 = vadd.f32 %v435, %v531
      %v548 = vadd.f32 %v436, %v532
      %v549 = vadd.f32 %v437, %v533
      %v550 = vadd.f32 %v438, %v534
      %551 = vset.pattern.permute.xlu0 2
      %552 = vperm.xlu0 %551, %v309
      %v553 = vpop.permute.xlu0 %552
      %554 = vset.pattern.permute.xlu0 2
      %555 = vperm.xlu0 %554, %v310
      %v556 = vpop.permute.xlu0 %555
      %557 = vset.pattern.permute.xlu0 2
      %558 = vperm.xlu0 %557, %v311
      %v559 = vpop.permute.xlu0 %558
      %560 = vset.pattern.permute.xlu0 2
      %561 = vperm.xlu0 %560, %v312
      %v562 = vpop.permute.xlu0 %561
      %563 = vset.pattern.permute.xlu0 2
      %564 = vperm.xlu0 %563, %v313
      %v565 = vpop.permute.xlu0 %564
      %566 = vset.pattern.permute.xlu0 2
      %567 = vperm.xlu0 %566, %v314
      %v568 = vpop.permute.xlu0 %567
      %569 = vset.pattern.permute.xlu0 2
      %570 = vperm.xlu0 %569, %v315
      %v571 = vpop.permute.xlu0 %570
      %572 = vset.pattern.permute.xlu0 2
      %573 = vperm.xlu0 %572, %v316
      %v574 = vpop.permute.xlu0 %573
      %575 = vset.pattern.permute.xlu0 2
      %576 = vperm.xlu0 %575, %v317
      %v577 = vpop.permute.xlu0 %576
      %578 = vset.pattern.permute.xlu0 2
      %579 = vperm.xlu0 %578, %v318
      %v580 = vpop.permute.xlu0 %579
      %581 = vset.pattern.permute.xlu0 2
      %582 = vperm.xlu0 %581, %v319
      %v583 = vpop.permute.xlu0 %582
      %584 = vset.pattern.permute.xlu0 2
      %585 = vperm.xlu0 %584, %v320
      %v586 = vpop.permute.xlu0 %585
      %587 = vset.pattern.permute.xlu0 2
      %588 = vperm.xlu0 %587, %v321
      %v589 = vpop.permute.xlu0 %588
      %590 = vset.pattern.permute.xlu0 2
      %591 = vperm.xlu0 %590, %v322
      %v592 = vpop.permute.xlu0 %591
      %593 = vset.pattern.permute.xlu0 2
      %594 = vperm.xlu0 %593, %v323
      %v595 = vpop.permute.xlu0 %594
      %596 = vset.pattern.permute.xlu0 2
      %597 = vperm.xlu0 %596, %v324
      %v598 = vpop.permute.xlu0 %597
      %vm599 = vcmp.eq.s32.totalorder %v553, %v326
      %vm600 = vcmp.eq.s32.totalorder %v556, %v326
      %vm601 = vcmp.eq.s32.totalorder %v559, %v326
      %vm602 = vcmp.eq.s32.totalorder %v562, %v326
      %vm603 = vcmp.eq.s32.totalorder %v565, %v326
      %vm604 = vcmp.eq.s32.totalorder %v568, %v326
      %vm605 = vcmp.eq.s32.totalorder %v571, %v326
      %vm606 = vcmp.eq.s32.totalorder %v574, %v326
      %vm607 = vcmp.eq.s32.totalorder %v577, %v326
      %vm608 = vcmp.eq.s32.totalorder %v580, %v326
      %vm609 = vcmp.eq.s32.totalorder %v583, %v326
      %vm610 = vcmp.eq.s32.totalorder %v586, %v326
      %vm611 = vcmp.eq.s32.totalorder %v589, %v326
      %vm612 = vcmp.eq.s32.totalorder %v592, %v326
      %vm613 = vcmp.eq.s32.totalorder %v595, %v326
      %vm614 = vcmp.eq.s32.totalorder %v598, %v326
      %v615 = vsel %vm599, 1, 0
      %v616 = vsel %vm600, 1, 0
      %v617 = vsel %vm601, 1, 0
      %v618 = vsel %vm602, 1, 0
      %v619 = vsel %vm603, 1, 0
      %v620 = vsel %vm604, 1, 0
      %v621 = vsel %vm605, 1, 0
      %v622 = vsel %vm606, 1, 0
      %v623 = vsel %vm607, 1, 0
      %v624 = vsel %vm608, 1, 0
      %v625 = vsel %vm609, 1, 0
      %v626 = vsel %vm610, 1, 0
      %v627 = vsel %vm611, 1, 0
      %v628 = vsel %vm612, 1, 0
      %v629 = vsel %vm613, 1, 0
      %v630 = vsel %vm614, 1, 0
      %v631 = vcvt.s32.f32 %v615
      %v632 = vcvt.s32.f32 %v616
      %v633 = vcvt.s32.f32 %v617
      %v634 = vcvt.s32.f32 %v618
      %v635 = vcvt.s32.f32 %v619
      %v636 = vcvt.s32.f32 %v620
      %v637 = vcvt.s32.f32 %v621
      %v638 = vcvt.s32.f32 %v622
      %v639 = vcvt.s32.f32 %v623
      %v640 = vcvt.s32.f32 %v624
      %v641 = vcvt.s32.f32 %v625
      %v642 = vcvt.s32.f32 %v626
      %v643 = vcvt.s32.f32 %v627
      %v644 = vcvt.s32.f32 %v628
      %v645 = vcvt.s32.f32 %v629
      %v646 = vcvt.s32.f32 %v630
      %v647 = vadd.f32 %v535, %v631
      %v648 = vadd.f32 %v536, %v632
      %v649 = vadd.f32 %v537, %v633
      %v650 = vadd.f32 %v538, %v634
      %v651 = vadd.f32 %v539, %v635
      %v652 = vadd.f32 %v540, %v636
      %v653 = vadd.f32 %v541, %v637
      %v654 = vadd.f32 %v542, %v638
      %v655 = vadd.f32 %v543, %v639
      %v656 = vadd.f32 %v544, %v640
      %v657 = vadd.f32 %v545, %v641
      %v658 = vadd.f32 %v546, %v642
      %v659 = vadd.f32 %v547, %v643
      %v660 = vadd.f32 %v548, %v644
      %v661 = vadd.f32 %v549, %v645
      %v662 = vadd.f32 %v550, %v646
      %663 = vset.pattern.permute.xlu0 3
      %664 = vperm.xlu0 %663, %v309
      %v665 = vpop.permute.xlu0 %664
      %666 = vset.pattern.permute.xlu0 3
      %667 = vperm.xlu0 %666, %v310
      %v668 = vpop.permute.xlu0 %667
      %669 = vset.pattern.permute.xlu0 3
      %670 = vperm.xlu0 %669, %v311
      %v671 = vpop.permute.xlu0 %670
      %672 = vset.pattern.permute.xlu0 3
      %673 = vperm.xlu0 %672, %v312
      %v674 = vpop.permute.xlu0 %673
      %675 = vset.pattern.permute.xlu0 3
      %676 = vperm.xlu0 %675, %v313
      %v677 = vpop.permute.xlu0 %676
      %678 = vset.pattern.permute.xlu0 3
      %679 = vperm.xlu0 %678, %v314
      %v680 = vpop.permute.xlu0 %679
      %681 = vset.pattern.permute.xlu0 3
      %682 = vperm.xlu0 %681, %v315
      %v683 = vpop.permute.xlu0 %682
      %684 = vset.pattern.permute.xlu0 3
      %685 = vperm.xlu0 %684, %v316
      %v686 = vpop.permute.xlu0 %685
      %687 = vset.pattern.permute.xlu0 3
      %688 = vperm.xlu0 %687, %v317
      %v689 = vpop.permute.xlu0 %688
      %690 = vset.pattern.permute.xlu0 3
      %691 = vperm.xlu0 %690, %v318
      %v692 = vpop.permute.xlu0 %691
      %693 = vset.pattern.permute.xlu0 3
      %694 = vperm.xlu0 %693, %v319
      %v695 = vpop.permute.xlu0 %694
      %696 = vset.pattern.permute.xlu0 3
      %697 = vperm.xlu0 %696, %v320
      %v698 = vpop.permute.xlu0 %697
      %699 = vset.pattern.permute.xlu0 3
      %700 = vperm.xlu0 %699, %v321
      %v701 = vpop.permute.xlu0 %700
      %702 = vset.pattern.permute.xlu0 3
      %703 = vperm.xlu0 %702, %v322
      %v704 = vpop.permute.xlu0 %703
      %705 = vset.pattern.permute.xlu0 3
      %706 = vperm.xlu0 %705, %v323
      %v707 = vpop.permute.xlu0 %706
      %708 = vset.pattern.permute.xlu0 3
      %709 = vperm.xlu0 %708, %v324
      %v710 = vpop.permute.xlu0 %709
      %vm711 = vcmp.eq.s32.totalorder %v665, %v326
      %vm712 = vcmp.eq.s32.totalorder %v668, %v326
      %vm713 = vcmp.eq.s32.totalorder %v671, %v326
      %vm714 = vcmp.eq.s32.totalorder %v674, %v326
      %vm715 = vcmp.eq.s32.totalorder %v677, %v326
      %vm716 = vcmp.eq.s32.totalorder %v680, %v326
      %vm717 = vcmp.eq.s32.totalorder %v683, %v326
      %vm718 = vcmp.eq.s32.totalorder %v686, %v326
      %vm719 = vcmp.eq.s32.totalorder %v689, %v326
      %vm720 = vcmp.eq.s32.totalorder %v692, %v326
      %vm721 = vcmp.eq.s32.totalorder %v695, %v326
      %vm722 = vcmp.eq.s32.totalorder %v698, %v326
      %vm723 = vcmp.eq.s32.totalorder %v701, %v326
      %vm724 = vcmp.eq.s32.totalorder %v704, %v326
      %vm725 = vcmp.eq.s32.totalorder %v707, %v326
      %vm726 = vcmp.eq.s32.totalorder %v710, %v326
      %v727 = vsel %vm711, 1, 0
      %v728 = vsel %vm712, 1, 0
      %v729 = vsel %vm713, 1, 0
      %v730 = vsel %vm714, 1, 0
      %v731 = vsel %vm715, 1, 0
      %v732 = vsel %vm716, 1, 0
      %v733 = vsel %vm717, 1, 0
      %v734 = vsel %vm718, 1, 0
      %v735 = vsel %vm719, 1, 0
      %v736 = vsel %vm720, 1, 0
      %v737 = vsel %vm721, 1, 0
      %v738 = vsel %vm722, 1, 0
      %v739 = vsel %vm723, 1, 0
      %v740 = vsel %vm724, 1, 0
      %v741 = vsel %vm725, 1, 0
      %v742 = vsel %vm726, 1, 0
      %v743 = vcvt.s32.f32 %v727
      %v744 = vcvt.s32.f32 %v728
      %v745 = vcvt.s32.f32 %v729
      %v746 = vcvt.s32.f32 %v730
      %v747 = vcvt.s32.f32 %v731
      %v748 = vcvt.s32.f32 %v732
      %v749 = vcvt.s32.f32 %v733
      %v750 = vcvt.s32.f32 %v734
      %v751 = vcvt.s32.f32 %v735
      %v752 = vcvt.s32.f32 %v736
      %v753 = vcvt.s32.f32 %v737
      %v754 = vcvt.s32.f32 %v738
      %v755 = vcvt.s32.f32 %v739
      %v756 = vcvt.s32.f32 %v740
      %v757 = vcvt.s32.f32 %v741
      %v758 = vcvt.s32.f32 %v742
      %v759 = vadd.f32 %v647, %v743
      %v760 = vadd.f32 %v648, %v744
      %v761 = vadd.f32 %v649, %v745
      %v762 = vadd.f32 %v650, %v746
      %v763 = vadd.f32 %v651, %v747
      %v764 = vadd.f32 %v652, %v748
      %v765 = vadd.f32 %v653, %v749
      %v766 = vadd.f32 %v654, %v750
      %v767 = vadd.f32 %v655, %v751
      %v768 = vadd.f32 %v656, %v752
      %v769 = vadd.f32 %v657, %v753
      %v770 = vadd.f32 %v658, %v754
      %v771 = vadd.f32 %v659, %v755
      %v772 = vadd.f32 %v660, %v756
      %v773 = vadd.f32 %v661, %v757
      %v774 = vadd.f32 %v662, %v758
      %775 = vset.pattern.permute.xlu0 4
      %776 = vperm.xlu0 %775, %v309
      %v777 = vpop.permute.xlu0 %776
      %778 = vset.pattern.permute.xlu0 4
      %779 = vperm.xlu0 %778, %v310
      %v780 = vpop.permute.xlu0 %779
      %781 = vset.pattern.permute.xlu0 4
      %782 = vperm.xlu0 %781, %v311
      %v783 = vpop.permute.xlu0 %782
      %784 = vset.pattern.permute.xlu0 4
      %785 = vperm.xlu0 %784, %v312
      %v786 = vpop.permute.xlu0 %785
      %787 = vset.pattern.permute.xlu0 4
      %788 = vperm.xlu0 %787, %v313
      %v789 = vpop.permute.xlu0 %788
      %790 = vset.pattern.permute.xlu0 4
      %791 = vperm.xlu0 %790, %v314
      %v792 = vpop.permute.xlu0 %791
      %793 = vset.pattern.permute.xlu0 4
      %794 = vperm.xlu0 %793, %v315
      %v795 = vpop.permute.xlu0 %794
      %796 = vset.pattern.permute.xlu0 4
      %797 = vperm.xlu0 %796, %v316
      %v798 = vpop.permute.xlu0 %797
      %799 = vset.pattern.permute.xlu0 4
      %800 = vperm.xlu0 %799, %v317
      %v801 = vpop.permute.xlu0 %800
      %802 = vset.pattern.permute.xlu0 4
      %803 = vperm.xlu0 %802, %v318
      %v804 = vpop.permute.xlu0 %803
      %805 = vset.pattern.permute.xlu0 4
      %806 = vperm.xlu0 %805, %v319
      %v807 = vpop.permute.xlu0 %806
      %808 = vset.pattern.permute.xlu0 4
      %809 = vperm.xlu0 %808, %v320
      %v810 = vpop.permute.xlu0 %809
      %811 = vset.pattern.permute.xlu0 4
      %812 = vperm.xlu0 %811, %v321
      %v813 = vpop.permute.xlu0 %812
      %814 = vset.pattern.permute.xlu0 4
      %815 = vperm.xlu0 %814, %v322
      %v816 = vpop.permute.xlu0 %815
      %817 = vset.pattern.permute.xlu0 4
      %818 = vperm.xlu0 %817, %v323
      %v819 = vpop.permute.xlu0 %818
      %820 = vset.pattern.permute.xlu0 4
      %821 = vperm.xlu0 %820, %v324
      %v822 = vpop.permute.xlu0 %821
      %vm823 = vcmp.eq.s32.totalorder %v777, %v326
      %vm824 = vcmp.eq.s32.totalorder %v780, %v326
      %vm825 = vcmp.eq.s32.totalorder %v783, %v326
      %vm826 = vcmp.eq.s32.totalorder %v786, %v326
      %vm827 = vcmp.eq.s32.totalorder %v789, %v326
      %vm828 = vcmp.eq.s32.totalorder %v792, %v326
      %vm829 = vcmp.eq.s32.totalorder %v795, %v326
      %vm830 = vcmp.eq.s32.totalorder %v798, %v326
      %vm831 = vcmp.eq.s32.totalorder %v801, %v326
      %vm832 = vcmp.eq.s32.totalorder %v804, %v326
      %vm833 = vcmp.eq.s32.totalorder %v807, %v326
      %vm834 = vcmp.eq.s32.totalorder %v810, %v326
      %vm835 = vcmp.eq.s32.totalorder %v813, %v326
      %vm836 = vcmp.eq.s32.totalorder %v816, %v326
      %vm837 = vcmp.eq.s32.totalorder %v819, %v326
      %vm838 = vcmp.eq.s32.totalorder %v822, %v326
      %v839 = vsel %vm823, 1, 0
      %v840 = vsel %vm824, 1, 0
      %v841 = vsel %vm825, 1, 0
      %v842 = vsel %vm826, 1, 0
      %v843 = vsel %vm827, 1, 0
      %v844 = vsel %vm828, 1, 0
      %v845 = vsel %vm829, 1, 0
      %v846 = vsel %vm830, 1, 0
      %v847 = vsel %vm831, 1, 0
      %v848 = vsel %vm832, 1, 0
      %v849 = vsel %vm833, 1, 0
      %v850 = vsel %vm834, 1, 0
      %v851 = vsel %vm835, 1, 0
      %v852 = vsel %vm836, 1, 0
      %v853 = vsel %vm837, 1, 0
      %v854 = vsel %vm838, 1, 0
      %v855 = vcvt.s32.f32 %v839
      %v856 = vcvt.s32.f32 %v840
      %v857 = vcvt.s32.f32 %v841
      %v858 = vcvt.s32.f32 %v842
      %v859 = vcvt.s32.f32 %v843
      %v860 = vcvt.s32.f32 %v844
      %v861 = vcvt.s32.f32 %v845
      %v862 = vcvt.s32.f32 %v846
      %v863 = vcvt.s32.f32 %v847
      %v864 = vcvt.s32.f32 %v848
      %v865 = vcvt.s32.f32 %v849
      %v866 = vcvt.s32.f32 %v850
      %v867 = vcvt.s32.f32 %v851
      %v868 = vcvt.s32.f32 %v852
      %v869 = vcvt.s32.f32 %v853
      %v870 = vcvt.s32.f32 %v854
      %v871 = vadd.f32 %v759, %v855
      %v872 = vadd.f32 %v760, %v856
      %v873 = vadd.f32 %v761, %v857
      %v874 = vadd.f32 %v762, %v858
      %v875 = vadd.f32 %v763, %v859
      %v876 = vadd.f32 %v764, %v860
      %v877 = vadd.f32 %v765, %v861
      %v878 = vadd.f32 %v766, %v862
      %v879 = vadd.f32 %v767, %v863
      %v880 = vadd.f32 %v768, %v864
      %v881 = vadd.f32 %v769, %v865
      %v882 = vadd.f32 %v770, %v866
      %v883 = vadd.f32 %v771, %v867
      %v884 = vadd.f32 %v772, %v868
      %v885 = vadd.f32 %v773, %v869
      %v886 = vadd.f32 %v774, %v870
      %887 = vset.pattern.permute.xlu0 5
      %888 = vperm.xlu0 %887, %v309
      %v889 = vpop.permute.xlu0 %888
      %890 = vset.pattern.permute.xlu0 5
      %891 = vperm.xlu0 %890, %v310
      %v892 = vpop.permute.xlu0 %891
      %893 = vset.pattern.permute.xlu0 5
      %894 = vperm.xlu0 %893, %v311
      %v895 = vpop.permute.xlu0 %894
      %896 = vset.pattern.permute.xlu0 5
      %897 = vperm.xlu0 %896, %v312
      %v898 = vpop.permute.xlu0 %897
      %899 = vset.pattern.permute.xlu0 5
      %900 = vperm.xlu0 %899, %v313
      %v901 = vpop.permute.xlu0 %900
      %902 = vset.pattern.permute.xlu0 5
      %903 = vperm.xlu0 %902, %v314
      %v904 = vpop.permute.xlu0 %903
      %905 = vset.pattern.permute.xlu0 5
      %906 = vperm.xlu0 %905, %v315
      %v907 = vpop.permute.xlu0 %906
      %908 = vset.pattern.permute.xlu0 5
      %909 = vperm.xlu0 %908, %v316
      %v910 = vpop.permute.xlu0 %909
      %911 = vset.pattern.permute.xlu0 5
      %912 = vperm.xlu0 %911, %v317
      %v913 = vpop.permute.xlu0 %912
      %914 = vset.pattern.permute.xlu0 5
      %915 = vperm.xlu0 %914, %v318
      %v916 = vpop.permute.xlu0 %915
      %917 = vset.pattern.permute.xlu0 5
      %918 = vperm.xlu0 %917, %v319
      %v919 = vpop.permute.xlu0 %918
      %920 = vset.pattern.permute.xlu0 5
      %921 = vperm.xlu0 %920, %v320
      %v922 = vpop.permute.xlu0 %921
      %923 = vset.pattern.permute.xlu0 5
      %924 = vperm.xlu0 %923, %v321
      %v925 = vpop.permute.xlu0 %924
      %926 = vset.pattern.permute.xlu0 5
      %927 = vperm.xlu0 %926, %v322
      %v928 = vpop.permute.xlu0 %927
      %929 = vset.pattern.permute.xlu0 5
      %930 = vperm.xlu0 %929, %v323
      %v931 = vpop.permute.xlu0 %930
      %932 = vset.pattern.permute.xlu0 5
      %933 = vperm.xlu0 %932, %v324
      %v934 = vpop.permute.xlu0 %933
      %vm935 = vcmp.eq.s32.totalorder %v889, %v326
      %vm936 = vcmp.eq.s32.totalorder %v892, %v326
      %vm937 = vcmp.eq.s32.totalorder %v895, %v326
      %vm938 = vcmp.eq.s32.totalorder %v898, %v326
      %vm939 = vcmp.eq.s32.totalorder %v901, %v326
      %vm940 = vcmp.eq.s32.totalorder %v904, %v326
      %vm941 = vcmp.eq.s32.totalorder %v907, %v326
      %vm942 = vcmp.eq.s32.totalorder %v910, %v326
      %vm943 = vcmp.eq.s32.totalorder %v913, %v326
      %vm944 = vcmp.eq.s32.totalorder %v916, %v326
      %vm945 = vcmp.eq.s32.totalorder %v919, %v326
      %vm946 = vcmp.eq.s32.totalorder %v922, %v326
      %vm947 = vcmp.eq.s32.totalorder %v925, %v326
      %vm948 = vcmp.eq.s32.totalorder %v928, %v326
      %vm949 = vcmp.eq.s32.totalorder %v931, %v326
      %vm950 = vcmp.eq.s32.totalorder %v934, %v326
      %v951 = vsel %vm935, 1, 0
      %v952 = vsel %vm936, 1, 0
      %v953 = vsel %vm937, 1, 0
      %v954 = vsel %vm938, 1, 0
      %v955 = vsel %vm939, 1, 0
      %v956 = vsel %vm940, 1, 0
      %v957 = vsel %vm941, 1, 0
      %v958 = vsel %vm942, 1, 0
      %v959 = vsel %vm943, 1, 0
      %v960 = vsel %vm944, 1, 0
      %v961 = vsel %vm945, 1, 0
      %v962 = vsel %vm946, 1, 0
      %v963 = vsel %vm947, 1, 0
      %v964 = vsel %vm948, 1, 0
      %v965 = vsel %vm949, 1, 0
      %v966 = vsel %vm950, 1, 0
      %v967 = vcvt.s32.f32 %v951
      %v968 = vcvt.s32.f32 %v952
      %v969 = vcvt.s32.f32 %v953
      %v970 = vcvt.s32.f32 %v954
      %v971 = vcvt.s32.f32 %v955
      %v972 = vcvt.s32.f32 %v956
      %v973 = vcvt.s32.f32 %v957
      %v974 = vcvt.s32.f32 %v958
      %v975 = vcvt.s32.f32 %v959
      %v976 = vcvt.s32.f32 %v960
      %v977 = vcvt.s32.f32 %v961
      %v978 = vcvt.s32.f32 %v962
      %v979 = vcvt.s32.f32 %v963
      %v980 = vcvt.s32.f32 %v964
      %v981 = vcvt.s32.f32 %v965
      %v982 = vcvt.s32.f32 %v966
      %v983 = vadd.f32 %v871, %v967
      %v984 = vadd.f32 %v872, %v968
      %v985 = vadd.f32 %v873, %v969
      %v986 = vadd.f32 %v874, %v970
      %v987 = vadd.f32 %v875, %v971
      %v988 = vadd.f32 %v876, %v972
      %v989 = vadd.f32 %v877, %v973
      %v990 = vadd.f32 %v878, %v974
      %v991 = vadd.f32 %v879, %v975
      %v992 = vadd.f32 %v880, %v976
      %v993 = vadd.f32 %v881, %v977
      %v994 = vadd.f32 %v882, %v978
      %v995 = vadd.f32 %v883, %v979
      %v996 = vadd.f32 %v884, %v980
      %v997 = vadd.f32 %v885, %v981
      %v998 = vadd.f32 %v886, %v982
      %999 = vset.pattern.permute.xlu0 6
      %1000 = vperm.xlu0 %999, %v309
      %v1001 = vpop.permute.xlu0 %1000
      %1002 = vset.pattern.permute.xlu0 6
      %1003 = vperm.xlu0 %1002, %v310
      %v1004 = vpop.permute.xlu0 %1003
      %1005 = vset.pattern.permute.xlu0 6
      %1006 = vperm.xlu0 %1005, %v311
      %v1007 = vpop.permute.xlu0 %1006
      %1008 = vset.pattern.permute.xlu0 6
      %1009 = vperm.xlu0 %1008, %v312
      %v1010 = vpop.permute.xlu0 %1009
      %1011 = vset.pattern.permute.xlu0 6
      %1012 = vperm.xlu0 %1011, %v313
      %v1013 = vpop.permute.xlu0 %1012
      %1014 = vset.pattern.permute.xlu0 6
      %1015 = vperm.xlu0 %1014, %v314
      %v1016 = vpop.permute.xlu0 %1015
      %1017 = vset.pattern.permute.xlu0 6
      %1018 = vperm.xlu0 %1017, %v315
      %v1019 = vpop.permute.xlu0 %1018
      %1020 = vset.pattern.permute.xlu0 6
      %1021 = vperm.xlu0 %1020, %v316
      %v1022 = vpop.permute.xlu0 %1021
      %1023 = vset.pattern.permute.xlu0 6
      %1024 = vperm.xlu0 %1023, %v317
      %v1025 = vpop.permute.xlu0 %1024
      %1026 = vset.pattern.permute.xlu0 6
      %1027 = vperm.xlu0 %1026, %v318
      %v1028 = vpop.permute.xlu0 %1027
      %1029 = vset.pattern.permute.xlu0 6
      %1030 = vperm.xlu0 %1029, %v319
      %v1031 = vpop.permute.xlu0 %1030
      %1032 = vset.pattern.permute.xlu0 6
      %1033 = vperm.xlu0 %1032, %v320
      %v1034 = vpop.permute.xlu0 %1033
      %1035 = vset.pattern.permute.xlu0 6
      %1036 = vperm.xlu0 %1035, %v321
      %v1037 = vpop.permute.xlu0 %1036
      %1038 = vset.pattern.permute.xlu0 6
      %1039 = vperm.xlu0 %1038, %v322
      %v1040 = vpop.permute.xlu0 %1039
      %1041 = vset.pattern.permute.xlu0 6
      %1042 = vperm.xlu0 %1041, %v323
      %v1043 = vpop.permute.xlu0 %1042
      %1044 = vset.pattern.permute.xlu0 6
      %1045 = vperm.xlu0 %1044, %v324
      %v1046 = vpop.permute.xlu0 %1045
      %vm1047 = vcmp.eq.s32.totalorder %v1001, %v326
      %vm1048 = vcmp.eq.s32.totalorder %v1004, %v326
      %vm1049 = vcmp.eq.s32.totalorder %v1007, %v326
      %vm1050 = vcmp.eq.s32.totalorder %v1010, %v326
      %vm1051 = vcmp.eq.s32.totalorder %v1013, %v326
      %vm1052 = vcmp.eq.s32.totalorder %v1016, %v326
      %vm1053 = vcmp.eq.s32.totalorder %v1019, %v326
      %vm1054 = vcmp.eq.s32.totalorder %v1022, %v326
      %vm1055 = vcmp.eq.s32.totalorder %v1025, %v326
      %vm1056 = vcmp.eq.s32.totalorder %v1028, %v326
      %vm1057 = vcmp.eq.s32.totalorder %v1031, %v326
      %vm1058 = vcmp.eq.s32.totalorder %v1034, %v326
      %vm1059 = vcmp.eq.s32.totalorder %v1037, %v326
      %vm1060 = vcmp.eq.s32.totalorder %v1040, %v326
      %vm1061 = vcmp.eq.s32.totalorder %v1043, %v326
      %vm1062 = vcmp.eq.s32.totalorder %v1046, %v326
      %v1063 = vsel %vm1047, 1, 0
      %v1064 = vsel %vm1048, 1, 0
      %v1065 = vsel %vm1049, 1, 0
      %v1066 = vsel %vm1050, 1, 0
      %v1067 = vsel %vm1051, 1, 0
      %v1068 = vsel %vm1052, 1, 0
      %v1069 = vsel %vm1053, 1, 0
      %v1070 = vsel %vm1054, 1, 0
      %v1071 = vsel %vm1055, 1, 0
      %v1072 = vsel %vm1056, 1, 0
      %v1073 = vsel %vm1057, 1, 0
      %v1074 = vsel %vm1058, 1, 0
      %v1075 = vsel %vm1059, 1, 0
      %v1076 = vsel %vm1060, 1, 0
      %v1077 = vsel %vm1061, 1, 0
      %v1078 = vsel %vm1062, 1, 0
      %v1079 = vcvt.s32.f32 %v1063
      %v1080 = vcvt.s32.f32 %v1064
      %v1081 = vcvt.s32.f32 %v1065
      %v1082 = vcvt.s32.f32 %v1066
      %v1083 = vcvt.s32.f32 %v1067
      %v1084 = vcvt.s32.f32 %v1068
      %v1085 = vcvt.s32.f32 %v1069
      %v1086 = vcvt.s32.f32 %v1070
      %v1087 = vcvt.s32.f32 %v1071
      %v1088 = vcvt.s32.f32 %v1072
      %v1089 = vcvt.s32.f32 %v1073
      %v1090 = vcvt.s32.f32 %v1074
      %v1091 = vcvt.s32.f32 %v1075
      %v1092 = vcvt.s32.f32 %v1076
      %v1093 = vcvt.s32.f32 %v1077
      %v1094 = vcvt.s32.f32 %v1078
      %v1095 = vadd.f32 %v983, %v1079
      %v1096 = vadd.f32 %v984, %v1080
      %v1097 = vadd.f32 %v985, %v1081
      %v1098 = vadd.f32 %v986, %v1082
      %v1099 = vadd.f32 %v987, %v1083
      %v1100 = vadd.f32 %v988, %v1084
      %v1101 = vadd.f32 %v989, %v1085
      %v1102 = vadd.f32 %v990, %v1086
      %v1103 = vadd.f32 %v991, %v1087
      %v1104 = vadd.f32 %v992, %v1088
      %v1105 = vadd.f32 %v993, %v1089
      %v1106 = vadd.f32 %v994, %v1090
      %v1107 = vadd.f32 %v995, %v1091
      %v1108 = vadd.f32 %v996, %v1092
      %v1109 = vadd.f32 %v997, %v1093
      %v1110 = vadd.f32 %v998, %v1094
      %1111 = vset.pattern.permute.xlu0 7
      %1112 = vperm.xlu0 %1111, %v309
      %v1113 = vpop.permute.xlu0 %1112
      %1114 = vset.pattern.permute.xlu0 7
      %1115 = vperm.xlu0 %1114, %v310
      %v1116 = vpop.permute.xlu0 %1115
      %1117 = vset.pattern.permute.xlu0 7
      %1118 = vperm.xlu0 %1117, %v311
      %v1119 = vpop.permute.xlu0 %1118
      %1120 = vset.pattern.permute.xlu0 7
      %1121 = vperm.xlu0 %1120, %v312
      %v1122 = vpop.permute.xlu0 %1121
      %1123 = vset.pattern.permute.xlu0 7
      %1124 = vperm.xlu0 %1123, %v313
      %v1125 = vpop.permute.xlu0 %1124
      %1126 = vset.pattern.permute.xlu0 7
      %1127 = vperm.xlu0 %1126, %v314
      %v1128 = vpop.permute.xlu0 %1127
      %1129 = vset.pattern.permute.xlu0 7
      %1130 = vperm.xlu0 %1129, %v315
      %v1131 = vpop.permute.xlu0 %1130
      %1132 = vset.pattern.permute.xlu0 7
      %1133 = vperm.xlu0 %1132, %v316
      %v1134 = vpop.permute.xlu0 %1133
      %1135 = vset.pattern.permute.xlu0 7
      %1136 = vperm.xlu0 %1135, %v317
      %v1137 = vpop.permute.xlu0 %1136
      %1138 = vset.pattern.permute.xlu0 7
      %1139 = vperm.xlu0 %1138, %v318
      %v1140 = vpop.permute.xlu0 %1139
      %1141 = vset.pattern.permute.xlu0 7
      %1142 = vperm.xlu0 %1141, %v319
      %v1143 = vpop.permute.xlu0 %1142
      %1144 = vset.pattern.permute.xlu0 7
      %1145 = vperm.xlu0 %1144, %v320
      %v1146 = vpop.permute.xlu0 %1145
      %1147 = vset.pattern.permute.xlu0 7
      %1148 = vperm.xlu0 %1147, %v321
      %v1149 = vpop.permute.xlu0 %1148
      %1150 = vset.pattern.permute.xlu0 7
      %1151 = vperm.xlu0 %1150, %v322
      %v1152 = vpop.permute.xlu0 %1151
      %1153 = vset.pattern.permute.xlu0 7
      %1154 = vperm.xlu0 %1153, %v323
      %v1155 = vpop.permute.xlu0 %1154
      %1156 = vset.pattern.permute.xlu0 7
      %1157 = vperm.xlu0 %1156, %v324
      %v1158 = vpop.permute.xlu0 %1157
      %vm1159 = vcmp.eq.s32.totalorder %v1113, %v326
      %vm1160 = vcmp.eq.s32.totalorder %v1116, %v326
      %vm1161 = vcmp.eq.s32.totalorder %v1119, %v326
      %vm1162 = vcmp.eq.s32.totalorder %v1122, %v326
      %vm1163 = vcmp.eq.s32.totalorder %v1125, %v326
      %vm1164 = vcmp.eq.s32.totalorder %v1128, %v326
      %vm1165 = vcmp.eq.s32.totalorder %v1131, %v326
      %vm1166 = vcmp.eq.s32.totalorder %v1134, %v326
      %vm1167 = vcmp.eq.s32.totalorder %v1137, %v326
      %vm1168 = vcmp.eq.s32.totalorder %v1140, %v326
      %vm1169 = vcmp.eq.s32.totalorder %v1143, %v326
      %vm1170 = vcmp.eq.s32.totalorder %v1146, %v326
      %vm1171 = vcmp.eq.s32.totalorder %v1149, %v326
      %vm1172 = vcmp.eq.s32.totalorder %v1152, %v326
      %vm1173 = vcmp.eq.s32.totalorder %v1155, %v326
      %vm1174 = vcmp.eq.s32.totalorder %v1158, %v326
      %v1175 = vsel %vm1159, 1, 0
      %v1176 = vsel %vm1160, 1, 0
      %v1177 = vsel %vm1161, 1, 0
      %v1178 = vsel %vm1162, 1, 0
      %v1179 = vsel %vm1163, 1, 0
      %v1180 = vsel %vm1164, 1, 0
      %v1181 = vsel %vm1165, 1, 0
      %v1182 = vsel %vm1166, 1, 0
      %v1183 = vsel %vm1167, 1, 0
      %v1184 = vsel %vm1168, 1, 0
      %v1185 = vsel %vm1169, 1, 0
      %v1186 = vsel %vm1170, 1, 0
      %v1187 = vsel %vm1171, 1, 0
      %v1188 = vsel %vm1172, 1, 0
      %v1189 = vsel %vm1173, 1, 0
      %v1190 = vsel %vm1174, 1, 0
      %v1191 = vcvt.s32.f32 %v1175
      %v1192 = vcvt.s32.f32 %v1176
      %v1193 = vcvt.s32.f32 %v1177
      %v1194 = vcvt.s32.f32 %v1178
      %v1195 = vcvt.s32.f32 %v1179
      %v1196 = vcvt.s32.f32 %v1180
      %v1197 = vcvt.s32.f32 %v1181
      %v1198 = vcvt.s32.f32 %v1182
      %v1199 = vcvt.s32.f32 %v1183
      %v1200 = vcvt.s32.f32 %v1184
      %v1201 = vcvt.s32.f32 %v1185
      %v1202 = vcvt.s32.f32 %v1186
      %v1203 = vcvt.s32.f32 %v1187
      %v1204 = vcvt.s32.f32 %v1188
      %v1205 = vcvt.s32.f32 %v1189
      %v1206 = vcvt.s32.f32 %v1190
      %v1207 = vadd.f32 %v1095, %v1191
      %v1208 = vadd.f32 %v1096, %v1192
      %v1209 = vadd.f32 %v1097, %v1193
      %v1210 = vadd.f32 %v1098, %v1194
      %v1211 = vadd.f32 %v1099, %v1195
      %v1212 = vadd.f32 %v1100, %v1196
      %v1213 = vadd.f32 %v1101, %v1197
      %v1214 = vadd.f32 %v1102, %v1198
      %v1215 = vadd.f32 %v1103, %v1199
      %v1216 = vadd.f32 %v1104, %v1200
      %v1217 = vadd.f32 %v1105, %v1201
      %v1218 = vadd.f32 %v1106, %v1202
      %v1219 = vadd.f32 %v1107, %v1203
      %v1220 = vadd.f32 %v1108, %v1204
      %v1221 = vadd.f32 %v1109, %v1205
      %v1222 = vadd.f32 %v1110, %v1206
      %1223 = vset.pattern.permute.xlu0 8
      %1224 = vperm.xlu0 %1223, %v309
      %v1225 = vpop.permute.xlu0 %1224
      %1226 = vset.pattern.permute.xlu0 8
      %1227 = vperm.xlu0 %1226, %v310
      %v1228 = vpop.permute.xlu0 %1227
      %1229 = vset.pattern.permute.xlu0 8
      %1230 = vperm.xlu0 %1229, %v311
      %v1231 = vpop.permute.xlu0 %1230
      %1232 = vset.pattern.permute.xlu0 8
      %1233 = vperm.xlu0 %1232, %v312
      %v1234 = vpop.permute.xlu0 %1233
      %1235 = vset.pattern.permute.xlu0 8
      %1236 = vperm.xlu0 %1235, %v313
      %v1237 = vpop.permute.xlu0 %1236
      %1238 = vset.pattern.permute.xlu0 8
      %1239 = vperm.xlu0 %1238, %v314
      %v1240 = vpop.permute.xlu0 %1239
      %1241 = vset.pattern.permute.xlu0 8
      %1242 = vperm.xlu0 %1241, %v315
      %v1243 = vpop.permute.xlu0 %1242
      %1244 = vset.pattern.permute.xlu0 8
      %1245 = vperm.xlu0 %1244, %v316
      %v1246 = vpop.permute.xlu0 %1245
      %1247 = vset.pattern.permute.xlu0 8
      %1248 = vperm.xlu0 %1247, %v317
      %v1249 = vpop.permute.xlu0 %1248
      %1250 = vset.pattern.permute.xlu0 8
      %1251 = vperm.xlu0 %1250, %v318
      %v1252 = vpop.permute.xlu0 %1251
      %1253 = vset.pattern.permute.xlu0 8
      %1254 = vperm.xlu0 %1253, %v319
      %v1255 = vpop.permute.xlu0 %1254
      %1256 = vset.pattern.permute.xlu0 8
      %1257 = vperm.xlu0 %1256, %v320
      %v1258 = vpop.permute.xlu0 %1257
      %1259 = vset.pattern.permute.xlu0 8
      %1260 = vperm.xlu0 %1259, %v321
      %v1261 = vpop.permute.xlu0 %1260
      %1262 = vset.pattern.permute.xlu0 8
      %1263 = vperm.xlu0 %1262, %v322
      %v1264 = vpop.permute.xlu0 %1263
      %1265 = vset.pattern.permute.xlu0 8
      %1266 = vperm.xlu0 %1265, %v323
      %v1267 = vpop.permute.xlu0 %1266
      %1268 = vset.pattern.permute.xlu0 8
      %1269 = vperm.xlu0 %1268, %v324
      %v1270 = vpop.permute.xlu0 %1269
      %vm1271 = vcmp.eq.s32.totalorder %v1225, %v326
      %vm1272 = vcmp.eq.s32.totalorder %v1228, %v326
      %vm1273 = vcmp.eq.s32.totalorder %v1231, %v326
      %vm1274 = vcmp.eq.s32.totalorder %v1234, %v326
      %vm1275 = vcmp.eq.s32.totalorder %v1237, %v326
      %vm1276 = vcmp.eq.s32.totalorder %v1240, %v326
      %vm1277 = vcmp.eq.s32.totalorder %v1243, %v326
      %vm1278 = vcmp.eq.s32.totalorder %v1246, %v326
      %vm1279 = vcmp.eq.s32.totalorder %v1249, %v326
      %vm1280 = vcmp.eq.s32.totalorder %v1252, %v326
      %vm1281 = vcmp.eq.s32.totalorder %v1255, %v326
      %vm1282 = vcmp.eq.s32.totalorder %v1258, %v326
      %vm1283 = vcmp.eq.s32.totalorder %v1261, %v326
      %vm1284 = vcmp.eq.s32.totalorder %v1264, %v326
      %vm1285 = vcmp.eq.s32.totalorder %v1267, %v326
      %vm1286 = vcmp.eq.s32.totalorder %v1270, %v326
      %v1287 = vsel %vm1271, 1, 0
      %v1288 = vsel %vm1272, 1, 0
      %v1289 = vsel %vm1273, 1, 0
      %v1290 = vsel %vm1274, 1, 0
      %v1291 = vsel %vm1275, 1, 0
      %v1292 = vsel %vm1276, 1, 0
      %v1293 = vsel %vm1277, 1, 0
      %v1294 = vsel %vm1278, 1, 0
      %v1295 = vsel %vm1279, 1, 0
      %v1296 = vsel %vm1280, 1, 0
      %v1297 = vsel %vm1281, 1, 0
      %v1298 = vsel %vm1282, 1, 0
      %v1299 = vsel %vm1283, 1, 0
      %v1300 = vsel %vm1284, 1, 0
      %v1301 = vsel %vm1285, 1, 0
      %v1302 = vsel %vm1286, 1, 0
      %v1303 = vcvt.s32.f32 %v1287
      %v1304 = vcvt.s32.f32 %v1288
      %v1305 = vcvt.s32.f32 %v1289
      %v1306 = vcvt.s32.f32 %v1290
      %v1307 = vcvt.s32.f32 %v1291
      %v1308 = vcvt.s32.f32 %v1292
      %v1309 = vcvt.s32.f32 %v1293
      %v1310 = vcvt.s32.f32 %v1294
      %v1311 = vcvt.s32.f32 %v1295
      %v1312 = vcvt.s32.f32 %v1296
      %v1313 = vcvt.s32.f32 %v1297
      %v1314 = vcvt.s32.f32 %v1298
      %v1315 = vcvt.s32.f32 %v1299
      %v1316 = vcvt.s32.f32 %v1300
      %v1317 = vcvt.s32.f32 %v1301
      %v1318 = vcvt.s32.f32 %v1302
      %v1319 = vadd.f32 %v1207, %v1303
      %v1320 = vadd.f32 %v1208, %v1304
      %v1321 = vadd.f32 %v1209, %v1305
      %v1322 = vadd.f32 %v1210, %v1306
      %v1323 = vadd.f32 %v1211, %v1307
      %v1324 = vadd.f32 %v1212, %v1308
      %v1325 = vadd.f32 %v1213, %v1309
      %v1326 = vadd.f32 %v1214, %v1310
      %v1327 = vadd.f32 %v1215, %v1311
      %v1328 = vadd.f32 %v1216, %v1312
      %v1329 = vadd.f32 %v1217, %v1313
      %v1330 = vadd.f32 %v1218, %v1314
      %v1331 = vadd.f32 %v1219, %v1315
      %v1332 = vadd.f32 %v1220, %v1316
      %v1333 = vadd.f32 %v1221, %v1317
      %v1334 = vadd.f32 %v1222, %v1318
      %1335 = vset.pattern.permute.xlu0 9
      %1336 = vperm.xlu0 %1335, %v309
      %v1337 = vpop.permute.xlu0 %1336
      %1338 = vset.pattern.permute.xlu0 9
      %1339 = vperm.xlu0 %1338, %v310
      %v1340 = vpop.permute.xlu0 %1339
      %1341 = vset.pattern.permute.xlu0 9
      %1342 = vperm.xlu0 %1341, %v311
      %v1343 = vpop.permute.xlu0 %1342
      %1344 = vset.pattern.permute.xlu0 9
      %1345 = vperm.xlu0 %1344, %v312
      %v1346 = vpop.permute.xlu0 %1345
      %1347 = vset.pattern.permute.xlu0 9
      %1348 = vperm.xlu0 %1347, %v313
      %v1349 = vpop.permute.xlu0 %1348
      %1350 = vset.pattern.permute.xlu0 9
      %1351 = vperm.xlu0 %1350, %v314
      %v1352 = vpop.permute.xlu0 %1351
      %1353 = vset.pattern.permute.xlu0 9
      %1354 = vperm.xlu0 %1353, %v315
      %v1355 = vpop.permute.xlu0 %1354
      %1356 = vset.pattern.permute.xlu0 9
      %1357 = vperm.xlu0 %1356, %v316
      %v1358 = vpop.permute.xlu0 %1357
      %1359 = vset.pattern.permute.xlu0 9
      %1360 = vperm.xlu0 %1359, %v317
      %v1361 = vpop.permute.xlu0 %1360
      %1362 = vset.pattern.permute.xlu0 9
      %1363 = vperm.xlu0 %1362, %v318
      %v1364 = vpop.permute.xlu0 %1363
      %1365 = vset.pattern.permute.xlu0 9
      %1366 = vperm.xlu0 %1365, %v319
      %v1367 = vpop.permute.xlu0 %1366
      %1368 = vset.pattern.permute.xlu0 9
      %1369 = vperm.xlu0 %1368, %v320
      %v1370 = vpop.permute.xlu0 %1369
      %1371 = vset.pattern.permute.xlu0 9
      %1372 = vperm.xlu0 %1371, %v321
      %v1373 = vpop.permute.xlu0 %1372
      %1374 = vset.pattern.permute.xlu0 9
      %1375 = vperm.xlu0 %1374, %v322
      %v1376 = vpop.permute.xlu0 %1375
      %1377 = vset.pattern.permute.xlu0 9
      %1378 = vperm.xlu0 %1377, %v323
      %v1379 = vpop.permute.xlu0 %1378
      %1380 = vset.pattern.permute.xlu0 9
      %1381 = vperm.xlu0 %1380, %v324
      %v1382 = vpop.permute.xlu0 %1381
      %vm1383 = vcmp.eq.s32.totalorder %v1337, %v326
      %vm1384 = vcmp.eq.s32.totalorder %v1340, %v326
      %vm1385 = vcmp.eq.s32.totalorder %v1343, %v326
      %vm1386 = vcmp.eq.s32.totalorder %v1346, %v326
      %vm1387 = vcmp.eq.s32.totalorder %v1349, %v326
      %vm1388 = vcmp.eq.s32.totalorder %v1352, %v326
      %vm1389 = vcmp.eq.s32.totalorder %v1355, %v326
      %vm1390 = vcmp.eq.s32.totalorder %v1358, %v326
      %vm1391 = vcmp.eq.s32.totalorder %v1361, %v326
      %vm1392 = vcmp.eq.s32.totalorder %v1364, %v326
      %vm1393 = vcmp.eq.s32.totalorder %v1367, %v326
      %vm1394 = vcmp.eq.s32.totalorder %v1370, %v326
      %vm1395 = vcmp.eq.s32.totalorder %v1373, %v326
      %vm1396 = vcmp.eq.s32.totalorder %v1376, %v326
      %vm1397 = vcmp.eq.s32.totalorder %v1379, %v326
      %vm1398 = vcmp.eq.s32.totalorder %v1382, %v326
      %v1399 = vsel %vm1383, 1, 0
      %v1400 = vsel %vm1384, 1, 0
      %v1401 = vsel %vm1385, 1, 0
      %v1402 = vsel %vm1386, 1, 0
      %v1403 = vsel %vm1387, 1, 0
      %v1404 = vsel %vm1388, 1, 0
      %v1405 = vsel %vm1389, 1, 0
      %v1406 = vsel %vm1390, 1, 0
      %v1407 = vsel %vm1391, 1, 0
      %v1408 = vsel %vm1392, 1, 0
      %v1409 = vsel %vm1393, 1, 0
      %v1410 = vsel %vm1394, 1, 0
      %v1411 = vsel %vm1395, 1, 0
      %v1412 = vsel %vm1396, 1, 0
      %v1413 = vsel %vm1397, 1, 0
      %v1414 = vsel %vm1398, 1, 0
      %v1415 = vcvt.s32.f32 %v1399
      %v1416 = vcvt.s32.f32 %v1400
      %v1417 = vcvt.s32.f32 %v1401
      %v1418 = vcvt.s32.f32 %v1402
      %v1419 = vcvt.s32.f32 %v1403
      %v1420 = vcvt.s32.f32 %v1404
      %v1421 = vcvt.s32.f32 %v1405
      %v1422 = vcvt.s32.f32 %v1406
      %v1423 = vcvt.s32.f32 %v1407
      %v1424 = vcvt.s32.f32 %v1408
      %v1425 = vcvt.s32.f32 %v1409
      %v1426 = vcvt.s32.f32 %v1410
      %v1427 = vcvt.s32.f32 %v1411
      %v1428 = vcvt.s32.f32 %v1412
      %v1429 = vcvt.s32.f32 %v1413
      %v1430 = vcvt.s32.f32 %v1414
      %v1431 = vadd.f32 %v1319, %v1415
      %v1432 = vadd.f32 %v1320, %v1416
      %v1433 = vadd.f32 %v1321, %v1417
      %v1434 = vadd.f32 %v1322, %v1418
      %v1435 = vadd.f32 %v1323, %v1419
      %v1436 = vadd.f32 %v1324, %v1420
      %v1437 = vadd.f32 %v1325, %v1421
      %v1438 = vadd.f32 %v1326, %v1422
      %v1439 = vadd.f32 %v1327, %v1423
      %v1440 = vadd.f32 %v1328, %v1424
      %v1441 = vadd.f32 %v1329, %v1425
      %v1442 = vadd.f32 %v1330, %v1426
      %v1443 = vadd.f32 %v1331, %v1427
      %v1444 = vadd.f32 %v1332, %v1428
      %v1445 = vadd.f32 %v1333, %v1429
      %v1446 = vadd.f32 %v1334, %v1430
      %1447 = vset.pattern.permute.xlu0 10
      %1448 = vperm.xlu0 %1447, %v309
      %v1449 = vpop.permute.xlu0 %1448
      %1450 = vset.pattern.permute.xlu0 10
      %1451 = vperm.xlu0 %1450, %v310
      %v1452 = vpop.permute.xlu0 %1451
      %1453 = vset.pattern.permute.xlu0 10
      %1454 = vperm.xlu0 %1453, %v311
      %v1455 = vpop.permute.xlu0 %1454
      %1456 = vset.pattern.permute.xlu0 10
      %1457 = vperm.xlu0 %1456, %v312
      %v1458 = vpop.permute.xlu0 %1457
      %1459 = vset.pattern.permute.xlu0 10
      %1460 = vperm.xlu0 %1459, %v313
      %v1461 = vpop.permute.xlu0 %1460
      %1462 = vset.pattern.permute.xlu0 10
      %1463 = vperm.xlu0 %1462, %v314
      %v1464 = vpop.permute.xlu0 %1463
      %1465 = vset.pattern.permute.xlu0 10
      %1466 = vperm.xlu0 %1465, %v315
      %v1467 = vpop.permute.xlu0 %1466
      %1468 = vset.pattern.permute.xlu0 10
      %1469 = vperm.xlu0 %1468, %v316
      %v1470 = vpop.permute.xlu0 %1469
      %1471 = vset.pattern.permute.xlu0 10
      %1472 = vperm.xlu0 %1471, %v317
      %v1473 = vpop.permute.xlu0 %1472
      %1474 = vset.pattern.permute.xlu0 10
      %1475 = vperm.xlu0 %1474, %v318
      %v1476 = vpop.permute.xlu0 %1475
      %1477 = vset.pattern.permute.xlu0 10
      %1478 = vperm.xlu0 %1477, %v319
      %v1479 = vpop.permute.xlu0 %1478
      %1480 = vset.pattern.permute.xlu0 10
      %1481 = vperm.xlu0 %1480, %v320
      %v1482 = vpop.permute.xlu0 %1481
      %1483 = vset.pattern.permute.xlu0 10
      %1484 = vperm.xlu0 %1483, %v321
      %v1485 = vpop.permute.xlu0 %1484
      %1486 = vset.pattern.permute.xlu0 10
      %1487 = vperm.xlu0 %1486, %v322
      %v1488 = vpop.permute.xlu0 %1487
      %1489 = vset.pattern.permute.xlu0 10
      %1490 = vperm.xlu0 %1489, %v323
      %v1491 = vpop.permute.xlu0 %1490
      %1492 = vset.pattern.permute.xlu0 10
      %1493 = vperm.xlu0 %1492, %v324
      %v1494 = vpop.permute.xlu0 %1493
      %vm1495 = vcmp.eq.s32.totalorder %v1449, %v326
      %vm1496 = vcmp.eq.s32.totalorder %v1452, %v326
      %vm1497 = vcmp.eq.s32.totalorder %v1455, %v326
      %vm1498 = vcmp.eq.s32.totalorder %v1458, %v326
      %vm1499 = vcmp.eq.s32.totalorder %v1461, %v326
      %vm1500 = vcmp.eq.s32.totalorder %v1464, %v326
      %vm1501 = vcmp.eq.s32.totalorder %v1467, %v326
      %vm1502 = vcmp.eq.s32.totalorder %v1470, %v326
      %vm1503 = vcmp.eq.s32.totalorder %v1473, %v326
      %vm1504 = vcmp.eq.s32.totalorder %v1476, %v326
      %vm1505 = vcmp.eq.s32.totalorder %v1479, %v326
      %vm1506 = vcmp.eq.s32.totalorder %v1482, %v326
      %vm1507 = vcmp.eq.s32.totalorder %v1485, %v326
      %vm1508 = vcmp.eq.s32.totalorder %v1488, %v326
      %vm1509 = vcmp.eq.s32.totalorder %v1491, %v326
      %vm1510 = vcmp.eq.s32.totalorder %v1494, %v326
      %v1511 = vsel %vm1495, 1, 0
      %v1512 = vsel %vm1496, 1, 0
      %v1513 = vsel %vm1497, 1, 0
      %v1514 = vsel %vm1498, 1, 0
      %v1515 = vsel %vm1499, 1, 0
      %v1516 = vsel %vm1500, 1, 0
      %v1517 = vsel %vm1501, 1, 0
      %v1518 = vsel %vm1502, 1, 0
      %v1519 = vsel %vm1503, 1, 0
      %v1520 = vsel %vm1504, 1, 0
      %v1521 = vsel %vm1505, 1, 0
      %v1522 = vsel %vm1506, 1, 0
      %v1523 = vsel %vm1507, 1, 0
      %v1524 = vsel %vm1508, 1, 0
      %v1525 = vsel %vm1509, 1, 0
      %v1526 = vsel %vm1510, 1, 0
      %v1527 = vcvt.s32.f32 %v1511
      %v1528 = vcvt.s32.f32 %v1512
      %v1529 = vcvt.s32.f32 %v1513
      %v1530 = vcvt.s32.f32 %v1514
      %v1531 = vcvt.s32.f32 %v1515
      %v1532 = vcvt.s32.f32 %v1516
      %v1533 = vcvt.s32.f32 %v1517
      %v1534 = vcvt.s32.f32 %v1518
      %v1535 = vcvt.s32.f32 %v1519
      %v1536 = vcvt.s32.f32 %v1520
      %v1537 = vcvt.s32.f32 %v1521
      %v1538 = vcvt.s32.f32 %v1522
      %v1539 = vcvt.s32.f32 %v1523
      %v1540 = vcvt.s32.f32 %v1524
      %v1541 = vcvt.s32.f32 %v1525
      %v1542 = vcvt.s32.f32 %v1526
      %v1543 = vadd.f32 %v1431, %v1527
      %v1544 = vadd.f32 %v1432, %v1528
      %v1545 = vadd.f32 %v1433, %v1529
      %v1546 = vadd.f32 %v1434, %v1530
      %v1547 = vadd.f32 %v1435, %v1531
      %v1548 = vadd.f32 %v1436, %v1532
      %v1549 = vadd.f32 %v1437, %v1533
      %v1550 = vadd.f32 %v1438, %v1534
      %v1551 = vadd.f32 %v1439, %v1535
      %v1552 = vadd.f32 %v1440, %v1536
      %v1553 = vadd.f32 %v1441, %v1537
      %v1554 = vadd.f32 %v1442, %v1538
      %v1555 = vadd.f32 %v1443, %v1539
      %v1556 = vadd.f32 %v1444, %v1540
      %v1557 = vadd.f32 %v1445, %v1541
      %v1558 = vadd.f32 %v1446, %v1542
      %v1559 = vld [vmem:[%s1] sm:$0xff]
      %v1560 = vld [vmem:[%s1 + $0x8] sm:$0xff]
      %v1561 = vld [vmem:[%s1 + $0x10] sm:$0xff]
      %v1562 = vld [vmem:[%s1 + $0x18] sm:$0xff]
      %v1563 = vld [vmem:[%s1 + $0x20] sm:$0xff]
      %v1564 = vld [vmem:[%s1 + $0x28] sm:$0xff]
      %v1565 = vld [vmem:[%s1 + $0x30] sm:$0xff]
      %v1566 = vld [vmem:[%s1 + $0x38] sm:$0xff]
      %v1567 = vld [vmem:[%s1 + $0x40] sm:$0xff]
      %v1568 = vld [vmem:[%s1 + $0x48] sm:$0xff]
      %v1569 = vld [vmem:[%s1 + $0x50] sm:$0xff]
      %v1570 = vld [vmem:[%s1 + $0x58] sm:$0xff]
      %v1571 = vld [vmem:[%s1 + $0x60] sm:$0xff]
      %v1572 = vld [vmem:[%s1 + $0x68] sm:$0xff]
      %v1573 = vld [vmem:[%s1 + $0x70] sm:$0xff]
      %v1574 = vld [vmem:[%s1 + $0x78] sm:$0xff]
      %v1575 = vld [vmem:[%s1 + $0x80] sm:$0xff]
      %v1576 = vld [vmem:[%s1 + $0x88] sm:$0xff]
      %v1577 = vld [vmem:[%s1 + $0x90] sm:$0xff]
      %v1578 = vld [vmem:[%s1 + $0x98] sm:$0xff]
      %v1579 = vld [vmem:[%s1 + $0xa0] sm:$0xff]
      %v1580 = vld [vmem:[%s1 + $0xa8] sm:$0xff]
      %v1581 = vld [vmem:[%s1 + $0xb0] sm:$0xff]
      %v1582 = vld [vmem:[%s1 + $0xb8] sm:$0xff]
      %vm1583 = vcmask 523264
      %v1585 = vsel %vm1583, %v1543, 0
      %v1588 = vsel %vm1583, %v1544, 0
      %v1591 = vsel %vm1583, %v1545, 0
      %v1594 = vsel %vm1583, %v1546, 0
      %v1597 = vsel %vm1583, %v1547, 0
      %v1600 = vsel %vm1583, %v1548, 0
      %v1603 = vsel %vm1583, %v1549, 0
      %v1606 = vsel %vm1583, %v1550, 0
      %v1609 = vsel %vm1583, %v1551, 0
      %v1612 = vsel %vm1583, %v1552, 0
      %v1615 = vsel %vm1583, %v1553, 0
      %v1618 = vsel %vm1583, %v1554, 0
      %v1621 = vsel %vm1583, %v1555, 0
      %v1624 = vsel %vm1583, %v1556, 0
      %v1627 = vsel %vm1583, %v1557, 0
      %v1630 = vsel %vm1583, %v1558, 0
      %1632 = vmatprep.subr.mxu0 %v1560
      %1633 = vmatpush1.msra.mxu0 %v1559
      %1634 = vmatprep.subr.mxu0 %v1563
      %1635 = vmatpush1.msra.mxu0 %v1562
      %1636 = vmatprep.subr.mxu0 %v1566
      %1637 = vmatpush1.msra.mxu0 %v1565
      %1638 = vmatprep.subr.mxu0 %v1569
      %1639 = vmatpush1.msra.mxu0 %v1568
      %1640 = vmatprep.subr.mxu0 %v1572
      %1641 = vmatpush1.msra.mxu0 %v1571
      %1642 = vmatprep.subr.mxu0 %v1575
      %1643 = vmatpush1.msra.mxu0 %v1574
      %1644 = vmatprep.subr.mxu0 %v1578
      %1645 = vmatpush1.msra.mxu0 %v1577
      %1646 = vmatprep.subr.mxu0 %v1581
      %1647 = vmatpush1.msra.mxu0 %v1580
      %1648 = vmatprep.subr.mxu0 0.0
      %1649 = vmatpush1.msra.mxu0 0.0
      %1650 = vmatprep.subr.mxu0 0.0
      %1651 = vmatpush1.msra.mxu0 0.0
      %1652 = vmatprep.subr.mxu0 0.0
      %1653 = vmatpush1.msra.mxu0 0.0
      %1654 = vmatprep.subr.mxu0 0.0
      %1655 = vmatpush1.msra.mxu0 0.0
      %1656 = vmatprep.subr.mxu0 0.0
      %1657 = vmatpush1.msra.mxu0 0.0
      %1658 = vmatprep.subr.mxu0 0.0
      %1659 = vmatpush1.msra.mxu0 0.0
      %1660 = vmatprep.subr.mxu0 0.0
      %1661 = vmatpush1.msra.mxu0 0.0
      %1662 = vmatprep.subr.mxu0 0.0
      %1663 = vmatpush1.msra.mxu0 0.0
      %1664 = vmatprep.subr.mxu0 0.0
      %1665 = vmatpush1.msra.mxu0 0.0
      %1666 = vmatprep.subr.mxu0 0.0
      %1667 = vmatpush1.msra.mxu0 0.0
      %1668 = vmatprep.subr.mxu0 0.0
      %1669 = vmatpush1.msra.mxu0 0.0
      %1670 = vmatprep.subr.mxu0 0.0
      %1671 = vmatpush1.msra.mxu0 0.0
      %1672 = vmatprep.subr.mxu0 0.0
      %1673 = vmatpush1.msra.mxu0 0.0
      %1674 = vmatprep.subr.mxu0 0.0
      %1675 = vmatpush1.msra.mxu0 0.0
      %1676 = vmatprep.subr.mxu0 0.0
      %1677 = vmatpush1.msra.mxu0 0.0
      %1678 = vmatprep.subr.mxu0 0.0
      %1679 = vmatpush1.msra.mxu0 0.0
      %1680 = vmatprep.subr.mxu0 0.0
      %1681 = vmatpush1.msra.mxu0 0.0
      %1682 = vmatprep.subr.mxu0 0.0
      %1683 = vmatpush1.msra.mxu0 0.0
      %1684 = vmatprep.subr.mxu0 0.0
      %1685 = vmatpush1.msra.mxu0 0.0
      %1686 = vmatprep.subr.mxu0 0.0
      %1687 = vmatpush1.msra.mxu0 0.0
      %1688 = vmatprep.subr.mxu0 0.0
      %1689 = vmatpush1.msra.mxu0 0.0
      %1690 = vmatprep.subr.mxu0 0.0
      %1691 = vmatpush1.msra.mxu0 0.0
      %1692 = vmatprep.subr.mxu0 0.0
      %1693 = vmatpush1.msra.mxu0 0.0
      %1694 = vmatprep.subr.mxu0 0.0
      %1695 = vmatpush1.msra.mxu0 0.0
      %1696 = vmatprep.mubr.f32.mxu0 0.0
      %1697 = vmatmul.mubr.f32.gmra.mrb[0].mxu0 %v1585
      %v1698 = vpop.f32.mrb[0].mxu0
      %v1699 = vadd.f32 0.0, %v1698
      %v1700 = vpop.f32.mrb[0].mxu0
      %v1701 = vadd.f32 0.0, %v1700
      %1702 = vmatprep.mubr.f32.mxu0 0.0
      %1703 = vmatmul.mubr.f32.gmra.mrb[0].mxu0 %v1588
      %v1704 = vpop.f32.mrb[0].mxu0
      %v1705 = vadd.f32 0.0, %v1704
      %v1706 = vpop.f32.mrb[0].mxu0
      %v1707 = vadd.f32 0.0, %v1706
      %1708 = vmatprep.mubr.f32.mxu0 0.0
      %1709 = vmatmul.mubr.f32.gmra.mrb[0].mxu0 %v1591
      %v1710 = vpop.f32.mrb[0].mxu0
      %v1711 = vadd.f32 0.0, %v1710
      %v1712 = vpop.f32.mrb[0].mxu0
      %v1713 = vadd.f32 0.0, %v1712
      %1714 = vmatprep.mubr.f32.mxu0 0.0
      %1715 = vmatmul.mubr.f32.gmra.mrb[0].mxu0 %v1594
      %v1716 = vpop.f32.mrb[0].mxu0
      %v1717 = vadd.f32 0.0, %v1716
      %v1718 = vpop.f32.mrb[0].mxu0
      %v1719 = vadd.f32 0.0, %v1718
      %1720 = vmatprep.mubr.f32.mxu0 0.0
      %1721 = vmatmul.mubr.f32.gmra.mrb[0].mxu0 %v1597
      %v1722 = vpop.f32.mrb[0].mxu0
      %v1723 = vadd.f32 0.0, %v1722
      %v1724 = vpop.f32.mrb[0].mxu0
      %v1725 = vadd.f32 0.0, %v1724
      %1726 = vmatprep.mubr.f32.mxu0 0.0
      %1727 = vmatmul.mubr.f32.gmra.mrb[0].mxu0 %v1600
      %v1728 = vpop.f32.mrb[0].mxu0
      %v1729 = vadd.f32 0.0, %v1728
      %v1730 = vpop.f32.mrb[0].mxu0
      %v1731 = vadd.f32 0.0, %v1730
      %1732 = vmatprep.mubr.f32.mxu0 0.0
      %1733 = vmatmul.mubr.f32.gmra.mrb[0].mxu0 %v1603
      %v1734 = vpop.f32.mrb[0].mxu0
      %v1735 = vadd.f32 0.0, %v1734
      %v1736 = vpop.f32.mrb[0].mxu0
      %v1737 = vadd.f32 0.0, %v1736
      %1738 = vmatprep.mubr.f32.mxu0 0.0
      %1739 = vmatmul.mubr.f32.gmra.mrb[0].mxu0 %v1606
      %v1740 = vpop.f32.mrb[0].mxu0
      %v1741 = vadd.f32 0.0, %v1740
      %v1742 = vpop.f32.mrb[0].mxu0
      %v1743 = vadd.f32 0.0, %v1742
      %1744 = vmatprep.mubr.f32.mxu0 0.0
      %1745 = vmatmul.mubr.f32.gmra.mrb[0].mxu0 %v1609
      %v1746 = vpop.f32.mrb[0].mxu0
      %v1747 = vadd.f32 0.0, %v1746
      %v1748 = vpop.f32.mrb[0].mxu0
      %v1749 = vadd.f32 0.0, %v1748
      %1750 = vmatprep.mubr.f32.mxu0 0.0
      %1751 = vmatmul.mubr.f32.gmra.mrb[0].mxu0 %v1612
      %v1752 = vpop.f32.mrb[0].mxu0
      %v1753 = vadd.f32 0.0, %v1752
      %v1754 = vpop.f32.mrb[0].mxu0
      %v1755 = vadd.f32 0.0, %v1754
      %1756 = vmatprep.mubr.f32.mxu0 0.0
      %1757 = vmatmul.mubr.f32.gmra.mrb[0].mxu0 %v1615
      %v1758 = vpop.f32.mrb[0].mxu0
      %v1759 = vadd.f32 0.0, %v1758
      %v1760 = vpop.f32.mrb[0].mxu0
      %v1761 = vadd.f32 0.0, %v1760
      %1762 = vmatprep.mubr.f32.mxu0 0.0
      %1763 = vmatmul.mubr.f32.gmra.mrb[0].mxu0 %v1618
      %v1764 = vpop.f32.mrb[0].mxu0
      %v1765 = vadd.f32 0.0, %v1764
      %v1766 = vpop.f32.mrb[0].mxu0
      %v1767 = vadd.f32 0.0, %v1766
      %1768 = vmatprep.mubr.f32.mxu0 0.0
      %1769 = vmatmul.mubr.f32.gmra.mrb[0].mxu0 %v1621
      %v1770 = vpop.f32.mrb[0].mxu0
      %v1771 = vadd.f32 0.0, %v1770
      %v1772 = vpop.f32.mrb[0].mxu0
      %v1773 = vadd.f32 0.0, %v1772
      %1774 = vmatprep.mubr.f32.mxu0 0.0
      %1775 = vmatmul.mubr.f32.gmra.mrb[0].mxu0 %v1624
      %v1776 = vpop.f32.mrb[0].mxu0
      %v1777 = vadd.f32 0.0, %v1776
      %v1778 = vpop.f32.mrb[0].mxu0
      %v1779 = vadd.f32 0.0, %v1778
      %1780 = vmatprep.mubr.f32.mxu0 0.0
      %1781 = vmatmul.mubr.f32.gmra.mrb[0].mxu0 %v1627
      %v1782 = vpop.f32.mrb[0].mxu0
      %v1783 = vadd.f32 0.0, %v1782
      %v1784 = vpop.f32.mrb[0].mxu0
      %v1785 = vadd.f32 0.0, %v1784
      %1786 = vmatprep.mubr.f32.mxu0 0.0
      %1787 = vmatmul.mubr.f32.gmra.mrb[0].mxu0 %v1630
      %v1788 = vpop.f32.mrb[0].mxu0
      %v1789 = vadd.f32 0.0, %v1788
      %v1790 = vpop.f32.mrb[0].mxu0
      %v1791 = vadd.f32 0.0, %v1790
      %1792 = vdwg.mxu0
      %1793 = vmatprep.subr.mxu0 0.0
      %1794 = vmatpush1.msra.mxu0 %v1561
      %1795 = vmatprep.subr.mxu0 0.0
      %1796 = vmatpush1.msra.mxu0 %v1564
      %1797 = vmatprep.subr.mxu0 0.0
      %1798 = vmatpush1.msra.mxu0 %v1567
      %1799 = vmatprep.subr.mxu0 0.0
      %1800 = vmatpush1.msra.mxu0 %v1570
      %1801 = vmatprep.subr.mxu0 0.0
      %1802 = vmatpush1.msra.mxu0 %v1573
      %1803 = vmatprep.subr.mxu0 0.0
      %1804 = vmatpush1.msra.mxu0 %v1576
      %1805 = vmatprep.subr.mxu0 0.0
      %1806 = vmatpush1.msra.mxu0 %v1579
      %1807 = vmatprep.subr.mxu0 0.0
      %1808 = vmatpush1.msra.mxu0 %v1582
      %1809 = vmatprep.subr.mxu0 0.0
      %1810 = vmatpush1.msra.mxu0 0.0
      %1811 = vmatprep.subr.mxu0 0.0
      %1812 = vmatpush1.msra.mxu0 0.0
      %1813 = vmatprep.subr.mxu0 0.0
      %1814 = vmatpush1.msra.mxu0 0.0
      %1815 = vmatprep.subr.mxu0 0.0
      %1816 = vmatpush1.msra.mxu0 0.0
      %1817 = vmatprep.subr.mxu0 0.0
      %1818 = vmatpush1.msra.mxu0 0.0
      %1819 = vmatprep.subr.mxu0 0.0
      %1820 = vmatpush1.msra.mxu0 0.0
      %1821 = vmatprep.subr.mxu0 0.0
      %1822 = vmatpush1.msra.mxu0 0.0
      %1823 = vmatprep.subr.mxu0 0.0
      %1824 = vmatpush1.msra.mxu0 0.0
      %1825 = vmatprep.subr.mxu0 0.0
      %1826 = vmatpush1.msra.mxu0 0.0
      %1827 = vmatprep.subr.mxu0 0.0
      %1828 = vmatpush1.msra.mxu0 0.0
      %1829 = vmatprep.subr.mxu0 0.0
      %1830 = vmatpush1.msra.mxu0 0.0
      %1831 = vmatprep.subr.mxu0 0.0
      %1832 = vmatpush1.msra.mxu0 0.0
      %1833 = vmatprep.subr.mxu0 0.0
      %1834 = vmatpush1.msra.mxu0 0.0
      %1835 = vmatprep.subr.mxu0 0.0
      %1836 = vmatpush1.msra.mxu0 0.0
      %1837 = vmatprep.subr.mxu0 0.0
      %1838 = vmatpush1.msra.mxu0 0.0
      %1839 = vmatprep.subr.mxu0 0.0
      %1840 = vmatpush1.msra.mxu0 0.0
      %1841 = vmatprep.subr.mxu0 0.0
      %1842 = vmatpush1.msra.mxu0 0.0
      %1843 = vmatprep.subr.mxu0 0.0
      %1844 = vmatpush1.msra.mxu0 0.0
      %1845 = vmatprep.subr.mxu0 0.0
      %1846 = vmatpush1.msra.mxu0 0.0
      %1847 = vmatprep.subr.mxu0 0.0
      %1848 = vmatpush1.msra.mxu0 0.0
      %1849 = vmatprep.subr.mxu0 0.0
      %1850 = vmatpush1.msra.mxu0 0.0
      %1851 = vmatprep.subr.mxu0 0.0
      %1852 = vmatpush1.msra.mxu0 0.0
      %1853 = vmatprep.subr.mxu0 0.0
      %1854 = vmatpush1.msra.mxu0 0.0
      %1855 = vmatprep.subr.mxu0 0.0
      %1856 = vmatpush1.msra.mxu0 0.0
      %1857 = vmatprep.mubr.f32.mxu0 0.0
      %1858 = vmatmul.mubr.f32.gmra.mrb[0].mxu0 %v1585
      %v1859 = vpop.f32.mrb[0].mxu0
      %v1860 = vadd.f32 0.0, %v1859
      %v1861 = vpop.f32.mrb[0].mxu0
      %1862 = vmatprep.mubr.f32.mxu0 0.0
      %1863 = vmatmul.mubr.f32.gmra.mrb[0].mxu0 %v1588
      %v1864 = vpop.f32.mrb[0].mxu0
      %v1865 = vadd.f32 0.0, %v1864
      %v1866 = vpop.f32.mrb[0].mxu0
      %1867 = vmatprep.mubr.f32.mxu0 0.0
      %1868 = vmatmul.mubr.f32.gmra.mrb[0].mxu0 %v1591
      %v1869 = vpop.f32.mrb[0].mxu0
      %v1870 = vadd.f32 0.0, %v1869
      %v1871 = vpop.f32.mrb[0].mxu0
      %1872 = vmatprep.mubr.f32.mxu0 0.0
      %1873 = vmatmul.mubr.f32.gmra.mrb[0].mxu0 %v1594
      %v1874 = vpop.f32.mrb[0].mxu0
      %v1875 = vadd.f32 0.0, %v1874
      %v1876 = vpop.f32.mrb[0].mxu0
      %1877 = vmatprep.mubr.f32.mxu0 0.0
      %1878 = vmatmul.mubr.f32.gmra.mrb[0].mxu0 %v1597
      %v1879 = vpop.f32.mrb[0].mxu0
      %v1880 = vadd.f32 0.0, %v1879
      %v1881 = vpop.f32.mrb[0].mxu0
      %1882 = vmatprep.mubr.f32.mxu0 0.0
      %1883 = vmatmul.mubr.f32.gmra.mrb[0].mxu0 %v1600
      %v1884 = vpop.f32.mrb[0].mxu0
      %v1885 = vadd.f32 0.0, %v1884
      %v1886 = vpop.f32.mrb[0].mxu0
      %1887 = vmatprep.mubr.f32.mxu0 0.0
      %1888 = vmatmul.mubr.f32.gmra.mrb[0].mxu0 %v1603
      %v1889 = vpop.f32.mrb[0].mxu0
      %v1890 = vadd.f32 0.0, %v1889
      %v1891 = vpop.f32.mrb[0].mxu0
      %1892 = vmatprep.mubr.f32.mxu0 0.0
      %1893 = vmatmul.mubr.f32.gmra.mrb[0].mxu0 %v1606
      %v1894 = vpop.f32.mrb[0].mxu0
      %v1895 = vadd.f32 0.0, %v1894
      %v1896 = vpop.f32.mrb[0].mxu0
      %1897 = vmatprep.mubr.f32.mxu0 0.0
      %1898 = vmatmul.mubr.f32.gmra.mrb[0].mxu0 %v1609
      %v1899 = vpop.f32.mrb[0].mxu0
      %v1900 = vadd.f32 0.0, %v1899
      %v1901 = vpop.f32.mrb[0].mxu0
      %1902 = vmatprep.mubr.f32.mxu0 0.0
      %1903 = vmatmul.mubr.f32.gmra.mrb[0].mxu0 %v1612
      %v1904 = vpop.f32.mrb[0].mxu0
      %v1905 = vadd.f32 0.0, %v1904
      %v1906 = vpop.f32.mrb[0].mxu0
      %1907 = vmatprep.mubr.f32.mxu0 0.0
      %1908 = vmatmul.mubr.f32.gmra.mrb[0].mxu0 %v1615
      %v1909 = vpop.f32.mrb[0].mxu0
      %v1910 = vadd.f32 0.0, %v1909
      %v1911 = vpop.f32.mrb[0].mxu0
      %1912 = vmatprep.mubr.f32.mxu0 0.0
      %1913 = vmatmul.mubr.f32.gmra.mrb[0].mxu0 %v1618
      %v1914 = vpop.f32.mrb[0].mxu0
      %v1915 = vadd.f32 0.0, %v1914
      %v1916 = vpop.f32.mrb[0].mxu0
      %1917 = vmatprep.mubr.f32.mxu0 0.0
      %1918 = vmatmul.mubr.f32.gmra.mrb[0].mxu0 %v1621
      %v1919 = vpop.f32.mrb[0].mxu0
      %v1920 = vadd.f32 0.0, %v1919
      %v1921 = vpop.f32.mrb[0].mxu0
      %1922 = vmatprep.mubr.f32.mxu0 0.0
      %1923 = vmatmul.mubr.f32.gmra.mrb[0].mxu0 %v1624
      %v1924 = vpop.f32.mrb[0].mxu0
      %v1925 = vadd.f32 0.0, %v1924
      %v1926 = vpop.f32.mrb[0].mxu0
      %1927 = vmatprep.mubr.f32.mxu0 0.0
      %1928 = vmatmul.mubr.f32.gmra.mrb[0].mxu0 %v1627
      %v1929 = vpop.f32.mrb[0].mxu0
      %v1930 = vadd.f32 0.0, %v1929
      %v1931 = vpop.f32.mrb[0].mxu0
      %1932 = vmatprep.mubr.f32.mxu0 0.0
      %1933 = vmatmul.mubr.f32.gmra.mrb[0].mxu0 %v1630
      %v1934 = vpop.f32.mrb[0].mxu0
      %v1935 = vadd.f32 0.0, %v1934
      %v1936 = vpop.f32.mrb[0].mxu0
      %1937 = vdwg.mxu0
      %v1938 = vld [vmem:[%s4] sm:$0xff]
      %v1939 = vld [vmem:[%s4 + $0x8] sm:$0xff]
      %v1940 = vld [vmem:[%s4 + $0x10] sm:$0xff]
      %v1941 = vld [vmem:[%s4 + $0x18] sm:$0xff]
      %v1942 = vld [vmem:[%s4 + $0x20] sm:$0xff]
      %v1943 = vld [vmem:[%s4 + $0x28] sm:$0xff]
      %v1944 = vld [vmem:[%s4 + $0x30] sm:$0xff]
      %v1945 = vld [vmem:[%s4 + $0x38] sm:$0xff]
      %v1946 = vld [vmem:[%s4 + $0x40] sm:$0xff]
      %v1947 = vld [vmem:[%s4 + $0x48] sm:$0xff]
      %v1948 = vld [vmem:[%s4 + $0x50] sm:$0xff]
      %v1949 = vld [vmem:[%s4 + $0x58] sm:$0xff]
      %v1950 = vld [vmem:[%s4 + $0x60] sm:$0xff]
      %v1951 = vld [vmem:[%s4 + $0x68] sm:$0xff]
      %v1952 = vld [vmem:[%s4 + $0x70] sm:$0xff]
      %v1953 = vld [vmem:[%s4 + $0x78] sm:$0xff]
      %v1954 = vmul.f32 %v1699, %v1701
      %v1955 = vmul.f32 %v1705, %v1707
      %v1956 = vmul.f32 %v1711, %v1713
      %v1957 = vmul.f32 %v1717, %v1719
      %v1958 = vmul.f32 %v1723, %v1725
      %v1959 = vmul.f32 %v1729, %v1731
      %v1960 = vmul.f32 %v1735, %v1737
      %v1961 = vmul.f32 %v1741, %v1743
      %v1962 = vmul.f32 %v1747, %v1749
      %v1963 = vmul.f32 %v1753, %v1755
      %v1964 = vmul.f32 %v1759, %v1761
      %v1965 = vmul.f32 %v1765, %v1767
      %v1966 = vmul.f32 %v1771, %v1773
      %v1967 = vmul.f32 %v1777, %v1779
      %v1968 = vmul.f32 %v1783, %v1785
      %v1969 = vmul.f32 %v1789, %v1791
      %1970 = vadd.xlane.f32.xlu0 %v1954
      %v1971 = vpop.xlane.xlu0 %1970
      %1972 = vadd.xlane.f32.xlu0 %v1955
      %v1973 = vpop.xlane.xlu0 %1972
      %1974 = vadd.xlane.f32.xlu0 %v1956
      %v1975 = vpop.xlane.xlu0 %1974
      %1976 = vadd.xlane.f32.xlu0 %v1957
      %v1977 = vpop.xlane.xlu0 %1976
      %1978 = vadd.xlane.f32.xlu0 %v1958
      %v1979 = vpop.xlane.xlu0 %1978
      %1980 = vadd.xlane.f32.xlu0 %v1959
      %v1981 = vpop.xlane.xlu0 %1980
      %1982 = vadd.xlane.f32.xlu0 %v1960
      %v1983 = vpop.xlane.xlu0 %1982
      %1984 = vadd.xlane.f32.xlu0 %v1961
      %v1985 = vpop.xlane.xlu0 %1984
      %1986 = vadd.xlane.f32.xlu0 %v1962
      %v1987 = vpop.xlane.xlu0 %1986
      %1988 = vadd.xlane.f32.xlu0 %v1963
      %v1989 = vpop.xlane.xlu0 %1988
      %1990 = vadd.xlane.f32.xlu0 %v1964
      %v1991 = vpop.xlane.xlu0 %1990
      %1992 = vadd.xlane.f32.xlu0 %v1965
      %v1993 = vpop.xlane.xlu0 %1992
      %1994 = vadd.xlane.f32.xlu0 %v1966
      %v1995 = vpop.xlane.xlu0 %1994
      %1996 = vadd.xlane.f32.xlu0 %v1967
      %v1997 = vpop.xlane.xlu0 %1996
      %1998 = vadd.xlane.f32.xlu0 %v1968
      %v1999 = vpop.xlane.xlu0 %1998
      %2000 = vadd.xlane.f32.xlu0 %v1969
      %v2001 = vpop.xlane.xlu0 %2000
      %v2002 = vld [vmem:[%s5] sm:$0xff]
      %v2003 = vmul.f32 %v1971, %v1938
      %v2004 = vmul.f32 %v1973, %v1939
      %v2005 = vmul.f32 %v1975, %v1940
      %v2006 = vmul.f32 %v1977, %v1941
      %v2007 = vmul.f32 %v1979, %v1942
      %v2008 = vmul.f32 %v1981, %v1943
      %v2009 = vmul.f32 %v1983, %v1944
      %v2010 = vmul.f32 %v1985, %v1945
      %v2011 = vmul.f32 %v1987, %v1946
      %v2012 = vmul.f32 %v1989, %v1947
      %v2013 = vmul.f32 %v1991, %v1948
      %v2014 = vmul.f32 %v1993, %v1949
      %v2015 = vmul.f32 %v1995, %v1950
      %v2016 = vmul.f32 %v1997, %v1951
      %v2017 = vmul.f32 %v1999, %v1952
      %v2018 = vmul.f32 %v2001, %v1953
      %2019 = vmatprep.subr.mxu0 0.0
      %2020 = vmatpush1.msra.mxu0 %v2003
      %2021 = vmatprep.subr.mxu0 0.0
      %2022 = vmatpush1.msra.mxu0 %v2004
      %2023 = vmatprep.subr.mxu0 0.0
      %2024 = vmatpush1.msra.mxu0 %v2005
      %2025 = vmatprep.subr.mxu0 0.0
      %2026 = vmatpush1.msra.mxu0 %v2006
      %2027 = vmatprep.subr.mxu0 0.0
      %2028 = vmatpush1.msra.mxu0 %v2007
      %2029 = vmatprep.subr.mxu0 0.0
      %2030 = vmatpush1.msra.mxu0 %v2008
      %2031 = vmatprep.subr.mxu0 0.0
      %2032 = vmatpush1.msra.mxu0 %v2009
      %2033 = vmatprep.subr.mxu0 0.0
      %2034 = vmatpush1.msra.mxu0 %v2010
      %2035 = vmatprep.subr.mxu0 0.0
      %2036 = vmatpush1.msra.mxu0 %v2011
      %2037 = vmatprep.subr.mxu0 0.0
      %2038 = vmatpush1.msra.mxu0 %v2012
      %2039 = vmatprep.subr.mxu0 0.0
      %2040 = vmatpush1.msra.mxu0 %v2013
      %2041 = vmatprep.subr.mxu0 0.0
      %2042 = vmatpush1.msra.mxu0 %v2014
      %2043 = vmatprep.subr.mxu0 0.0
      %2044 = vmatpush1.msra.mxu0 %v2015
      %2045 = vmatprep.subr.mxu0 0.0
      %2046 = vmatpush1.msra.mxu0 %v2016
      %2047 = vmatprep.subr.mxu0 0.0
      %2048 = vmatpush1.msra.mxu0 %v2017
      %2049 = vmatprep.subr.mxu0 0.0
      %2050 = vmatpush1.msra.mxu0 %v2018
      %2051 = vmatprep.subr.mxu0 0.0
      %2052 = vmatpush1.msra.mxu0 0.0
      %2053 = vmatprep.subr.mxu0 0.0
      %2054 = vmatpush1.msra.mxu0 0.0
      %2055 = vmatprep.subr.mxu0 0.0
      %2056 = vmatpush1.msra.mxu0 0.0
      %2057 = vmatprep.subr.mxu0 0.0
      %2058 = vmatpush1.msra.mxu0 0.0
      %2059 = vmatprep.subr.mxu0 0.0
      %2060 = vmatpush1.msra.mxu0 0.0
      %2061 = vmatprep.subr.mxu0 0.0
      %2062 = vmatpush1.msra.mxu0 0.0
      %2063 = vmatprep.subr.mxu0 0.0
      %2064 = vmatpush1.msra.mxu0 0.0
      %2065 = vmatprep.subr.mxu0 0.0
      %2066 = vmatpush1.msra.mxu0 0.0
      %2067 = vmatprep.subr.mxu0 0.0
      %2068 = vmatpush1.msra.mxu0 0.0
      %2069 = vmatprep.subr.mxu0 0.0
      %2070 = vmatpush1.msra.mxu0 0.0
      %2071 = vmatprep.subr.mxu0 0.0
      %2072 = vmatpush1.msra.mxu0 0.0
      %2073 = vmatprep.subr.mxu0 0.0
      %2074 = vmatpush1.msra.mxu0 0.0
      %2075 = vmatprep.subr.mxu0 0.0
      %2076 = vmatpush1.msra.mxu0 0.0
      %2077 = vmatprep.subr.mxu0 0.0
      %2078 = vmatpush1.msra.mxu0 0.0
      %2079 = vmatprep.subr.mxu0 0.0
      %2080 = vmatpush1.msra.mxu0 0.0
      %2081 = vmatprep.subr.mxu0 0.0
      %2082 = vmatpush1.msra.mxu0 0.0
      %2083 = vmatprep.mubr.f32.mxu0 0.0
      %2084 = vmatmul.mubr.f32.gmra.mrb[0].mxu0 %v2002
      %v2085 = vpop.f32.mrb[0].mxu0
      %v2086 = vadd.f32 0.0, %v2085
      %v2087 = vpop.f32.mrb[0].mxu0
      %2088 = vdwg.mxu0
      %vm2089 = vcmask 64512
      %v2090 = vsel %vm2089, %v2086, -inf
      %2091 = vmax.xlane.f32.xlu0 %v2090
      %v2092 = vpop.xlane.xlu0 %2091
      %v2093 = vsub.f32 %v2086, %v2092
      %v2094 = vmul.f32 %v2093, 1.442695
      %v2095 = vpow.pop %v2094
      %v2096 = vsel %vm2089, %v2095, 0.0
      %2097 = vadd.xlane.f32.xlu0 %v2096
      %v2098 = vpop.xlane.xlu0 %2097
      %v2099 = vrcp.pop %v2098
      %v2100 = vmul.f32 %v2098, %v2099
      %v2101 = vsub.f32 2.0, %v2100
      %v2102 = vmul.f32 %v2099, %v2101
      %v2103 = vmul.f32 %v2095, %v2102
      %v2104 = vld [vmem:[%s6] sm:$0xff]
      %v2105 = vld [vmem:[%s6 + $0x8] sm:$0xff]
      %v2106 = vld [vmem:[%s6 + $0x10] sm:$0xff]
      %v2107 = vld [vmem:[%s6 + $0x18] sm:$0xff]
      %v2108 = vld [vmem:[%s6 + $0x20] sm:$0xff]
      %v2109 = vld [vmem:[%s6 + $0x28] sm:$0xff]
      %v2110 = vld [vmem:[%s6 + $0x30] sm:$0xff]
      %v2111 = vld [vmem:[%s6 + $0x38] sm:$0xff]
      %v2112 = vld [vmem:[%s6 + $0x40] sm:$0xff]
      %v2113 = vld [vmem:[%s6 + $0x48] sm:$0xff]
      %v2114 = vld [vmem:[%s6 + $0x50] sm:$0xff]
      %v2115 = vld [vmem:[%s6 + $0x58] sm:$0xff]
      %v2116 = vld [vmem:[%s6 + $0x60] sm:$0xff]
      %v2117 = vld [vmem:[%s6 + $0x68] sm:$0xff]
      %v2118 = vld [vmem:[%s6 + $0x70] sm:$0xff]
      %v2119 = vld [vmem:[%s6 + $0x78] sm:$0xff]
      %v2121 = vsel %vm2089, %v2104, 0
      %v2124 = vsel %vm2089, %v2105, 0
      %v2127 = vsel %vm2089, %v2106, 0
      %v2130 = vsel %vm2089, %v2107, 0
      %v2133 = vsel %vm2089, %v2108, 0
      %v2136 = vsel %vm2089, %v2109, 0
      %v2139 = vsel %vm2089, %v2110, 0
      %v2142 = vsel %vm2089, %v2111, 0
      %v2145 = vsel %vm2089, %v2112, 0
      %v2148 = vsel %vm2089, %v2113, 0
      %v2151 = vsel %vm2089, %v2114, 0
      %v2154 = vsel %vm2089, %v2115, 0
      %v2157 = vsel %vm2089, %v2116, 0
      %v2160 = vsel %vm2089, %v2117, 0
      %v2163 = vsel %vm2089, %v2118, 0
      %v2166 = vsel %vm2089, %v2119, 0
      %2168 = vmatprep.subr.mxu0 0.0
      %2169 = vmatpush1.msra.mxu0 %v2103
      %2170 = vmatprep.subr.mxu0 0.0
      %2171 = vmatpush1.msra.mxu0 0.0
      %2172 = vmatprep.subr.mxu0 0.0
      %2173 = vmatpush1.msra.mxu0 0.0
      %2174 = vmatprep.subr.mxu0 0.0
      %2175 = vmatpush1.msra.mxu0 0.0
      %2176 = vmatprep.subr.mxu0 0.0
      %2177 = vmatpush1.msra.mxu0 0.0
      %2178 = vmatprep.subr.mxu0 0.0
      %2179 = vmatpush1.msra.mxu0 0.0
      %2180 = vmatprep.subr.mxu0 0.0
      %2181 = vmatpush1.msra.mxu0 0.0
      %2182 = vmatprep.subr.mxu0 0.0
      %2183 = vmatpush1.msra.mxu0 0.0
      %2184 = vmatprep.subr.mxu0 0.0
      %2185 = vmatpush1.msra.mxu0 0.0
      %2186 = vmatprep.subr.mxu0 0.0
      %2187 = vmatpush1.msra.mxu0 0.0
      %2188 = vmatprep.subr.mxu0 0.0
      %2189 = vmatpush1.msra.mxu0 0.0
      %2190 = vmatprep.subr.mxu0 0.0
      %2191 = vmatpush1.msra.mxu0 0.0
      %2192 = vmatprep.subr.mxu0 0.0
      %2193 = vmatpush1.msra.mxu0 0.0
      %2194 = vmatprep.subr.mxu0 0.0
      %2195 = vmatpush1.msra.mxu0 0.0
      %2196 = vmatprep.subr.mxu0 0.0
      %2197 = vmatpush1.msra.mxu0 0.0
      %2198 = vmatprep.subr.mxu0 0.0
      %2199 = vmatpush1.msra.mxu0 0.0
      %2200 = vmatprep.subr.mxu0 0.0
      %2201 = vmatpush1.msra.mxu0 0.0
      %2202 = vmatprep.subr.mxu0 0.0
      %2203 = vmatpush1.msra.mxu0 0.0
      %2204 = vmatprep.subr.mxu0 0.0
      %2205 = vmatpush1.msra.mxu0 0.0
      %2206 = vmatprep.subr.mxu0 0.0
      %2207 = vmatpush1.msra.mxu0 0.0
      %2208 = vmatprep.subr.mxu0 0.0
      %2209 = vmatpush1.msra.mxu0 0.0
      %2210 = vmatprep.subr.mxu0 0.0
      %2211 = vmatpush1.msra.mxu0 0.0
      %2212 = vmatprep.subr.mxu0 0.0
      %2213 = vmatpush1.msra.mxu0 0.0
      %2214 = vmatprep.subr.mxu0 0.0
      %2215 = vmatpush1.msra.mxu0 0.0
      %2216 = vmatprep.subr.mxu0 0.0
      %2217 = vmatpush1.msra.mxu0 0.0
      %2218 = vmatprep.subr.mxu0 0.0
      %2219 = vmatpush1.msra.mxu0 0.0
      %2220 = vmatprep.subr.mxu0 0.0
      %2221 = vmatpush1.msra.mxu0 0.0
      %2222 = vmatprep.subr.mxu0 0.0
      %2223 = vmatpush1.msra.mxu0 0.0
      %2224 = vmatprep.subr.mxu0 0.0
      %2225 = vmatpush1.msra.mxu0 0.0
      %2226 = vmatprep.subr.mxu0 0.0
      %2227 = vmatpush1.msra.mxu0 0.0
      %2228 = vmatprep.subr.mxu0 0.0
      %2229 = vmatpush1.msra.mxu0 0.0
      %2230 = vmatprep.subr.mxu0 0.0
      %2231 = vmatpush1.msra.mxu0 0.0
      %2232 = vmatprep.mubr.f32.mxu0 0.0
      %2233 = vmatmul.mubr.f32.gmra.mrb[0].mxu0 %v2121
      %v2234 = vpop.f32.mrb[0].mxu0
      %v2235 = vadd.f32 0.0, %v2234
      %v2236 = vpop.f32.mrb[0].mxu0
      %2237 = vmatprep.mubr.f32.mxu0 0.0
      %2238 = vmatmul.mubr.f32.gmra.mrb[0].mxu0 %v2124
      %v2239 = vpop.f32.mrb[0].mxu0
      %v2240 = vadd.f32 0.0, %v2239
      %v2241 = vpop.f32.mrb[0].mxu0
      %2242 = vmatprep.mubr.f32.mxu0 0.0
      %2243 = vmatmul.mubr.f32.gmra.mrb[0].mxu0 %v2127
      %v2244 = vpop.f32.mrb[0].mxu0
      %v2245 = vadd.f32 0.0, %v2244
      %v2246 = vpop.f32.mrb[0].mxu0
      %2247 = vmatprep.mubr.f32.mxu0 0.0
      %2248 = vmatmul.mubr.f32.gmra.mrb[0].mxu0 %v2130
      %v2249 = vpop.f32.mrb[0].mxu0
      %v2250 = vadd.f32 0.0, %v2249
      %v2251 = vpop.f32.mrb[0].mxu0
      %2252 = vmatprep.mubr.f32.mxu0 0.0
      %2253 = vmatmul.mubr.f32.gmra.mrb[0].mxu0 %v2133
      %v2254 = vpop.f32.mrb[0].mxu0
      %v2255 = vadd.f32 0.0, %v2254
      %v2256 = vpop.f32.mrb[0].mxu0
      %2257 = vmatprep.mubr.f32.mxu0 0.0
      %2258 = vmatmul.mubr.f32.gmra.mrb[0].mxu0 %v2136
      %v2259 = vpop.f32.mrb[0].mxu0
      %v2260 = vadd.f32 0.0, %v2259
      %v2261 = vpop.f32.mrb[0].mxu0
      %2262 = vmatprep.mubr.f32.mxu0 0.0
      %2263 = vmatmul.mubr.f32.gmra.mrb[0].mxu0 %v2139
      %v2264 = vpop.f32.mrb[0].mxu0
      %v2265 = vadd.f32 0.0, %v2264
      %v2266 = vpop.f32.mrb[0].mxu0
      %2267 = vmatprep.mubr.f32.mxu0 0.0
      %2268 = vmatmul.mubr.f32.gmra.mrb[0].mxu0 %v2142
      %v2269 = vpop.f32.mrb[0].mxu0
      %v2270 = vadd.f32 0.0, %v2269
      %v2271 = vpop.f32.mrb[0].mxu0
      %2272 = vmatprep.mubr.f32.mxu0 0.0
      %2273 = vmatmul.mubr.f32.gmra.mrb[0].mxu0 %v2145
      %v2274 = vpop.f32.mrb[0].mxu0
      %v2275 = vadd.f32 0.0, %v2274
      %v2276 = vpop.f32.mrb[0].mxu0
      %2277 = vmatprep.mubr.f32.mxu0 0.0
      %2278 = vmatmul.mubr.f32.gmra.mrb[0].mxu0 %v2148
      %v2279 = vpop.f32.mrb[0].mxu0
      %v2280 = vadd.f32 0.0, %v2279
      %v2281 = vpop.f32.mrb[0].mxu0
      %2282 = vmatprep.mubr.f32.mxu0 0.0
      %2283 = vmatmul.mubr.f32.gmra.mrb[0].mxu0 %v2151
      %v2284 = vpop.f32.mrb[0].mxu0
      %v2285 = vadd.f32 0.0, %v2284
      %v2286 = vpop.f32.mrb[0].mxu0
      %2287 = vmatprep.mubr.f32.mxu0 0.0
      %2288 = vmatmul.mubr.f32.gmra.mrb[0].mxu0 %v2154
      %v2289 = vpop.f32.mrb[0].mxu0
      %v2290 = vadd.f32 0.0, %v2289
      %v2291 = vpop.f32.mrb[0].mxu0
      %2292 = vmatprep.mubr.f32.mxu0 0.0
      %2293 = vmatmul.mubr.f32.gmra.mrb[0].mxu0 %v2157
      %v2294 = vpop.f32.mrb[0].mxu0
      %v2295 = vadd.f32 0.0, %v2294
      %v2296 = vpop.f32.mrb[0].mxu0
      %2297 = vmatprep.mubr.f32.mxu0 0.0
      %2298 = vmatmul.mubr.f32.gmra.mrb[0].mxu0 %v2160
      %v2299 = vpop.f32.mrb[0].mxu0
      %v2300 = vadd.f32 0.0, %v2299
      %v2301 = vpop.f32.mrb[0].mxu0
      %2302 = vmatprep.mubr.f32.mxu0 0.0
      %2303 = vmatmul.mubr.f32.gmra.mrb[0].mxu0 %v2163
      %v2304 = vpop.f32.mrb[0].mxu0
      %v2305 = vadd.f32 0.0, %v2304
      %v2306 = vpop.f32.mrb[0].mxu0
      %2307 = vmatprep.mubr.f32.mxu0 0.0
      %2308 = vmatmul.mubr.f32.gmra.mrb[0].mxu0 %v2166
      %v2309 = vpop.f32.mrb[0].mxu0
      %v2310 = vadd.f32 0.0, %v2309
      %v2311 = vpop.f32.mrb[0].mxu0
      %2312 = vdwg.mxu0
      %v2313 = vmul.f32 %v2235, %v1938
      %v2314 = vmul.f32 %v2240, %v1939
      %v2315 = vmul.f32 %v2245, %v1940
      %v2316 = vmul.f32 %v2250, %v1941
      %v2317 = vmul.f32 %v2255, %v1942
      %v2318 = vmul.f32 %v2260, %v1943
      %v2319 = vmul.f32 %v2265, %v1944
      %v2320 = vmul.f32 %v2270, %v1945
      %v2321 = vmul.f32 %v2275, %v1946
      %v2322 = vmul.f32 %v2280, %v1947
      %v2323 = vmul.f32 %v2285, %v1948
      %v2324 = vmul.f32 %v2290, %v1949
      %v2325 = vmul.f32 %v2295, %v1950
      %v2326 = vmul.f32 %v2300, %v1951
      %v2327 = vmul.f32 %v2305, %v1952
      %v2328 = vmul.f32 %v2310, %v1953
      %v2329 = vsel %vm2089, %v2313, 0.0
      %2330 = vadd.xlane.f32.xlu0 %v2329
      %v2331 = vpop.xlane.xlu0 %2330
      %v2332 = vsel %vm2089, %v2314, 0.0
      %2333 = vadd.xlane.f32.xlu0 %v2332
      %v2334 = vpop.xlane.xlu0 %2333
      %v2335 = vsel %vm2089, %v2315, 0.0
      %2336 = vadd.xlane.f32.xlu0 %v2335
      %v2337 = vpop.xlane.xlu0 %2336
      %v2338 = vsel %vm2089, %v2316, 0.0
      %2339 = vadd.xlane.f32.xlu0 %v2338
      %v2340 = vpop.xlane.xlu0 %2339
      %v2341 = vsel %vm2089, %v2317, 0.0
      %2342 = vadd.xlane.f32.xlu0 %v2341
      %v2343 = vpop.xlane.xlu0 %2342
      %v2344 = vsel %vm2089, %v2318, 0.0
      %2345 = vadd.xlane.f32.xlu0 %v2344
      %v2346 = vpop.xlane.xlu0 %2345
      %v2347 = vsel %vm2089, %v2319, 0.0
      %2348 = vadd.xlane.f32.xlu0 %v2347
      %v2349 = vpop.xlane.xlu0 %2348
      %v2350 = vsel %vm2089, %v2320, 0.0
      %2351 = vadd.xlane.f32.xlu0 %v2350
      %v2352 = vpop.xlane.xlu0 %2351
      %v2353 = vsel %vm2089, %v2321, 0.0
      %2354 = vadd.xlane.f32.xlu0 %v2353
      %v2355 = vpop.xlane.xlu0 %2354
      %v2356 = vsel %vm2089, %v2322, 0.0
      %2357 = vadd.xlane.f32.xlu0 %v2356
      %v2358 = vpop.xlane.xlu0 %2357
      %v2359 = vsel %vm2089, %v2323, 0.0
      %2360 = vadd.xlane.f32.xlu0 %v2359
      %v2361 = vpop.xlane.xlu0 %2360
      %v2362 = vsel %vm2089, %v2324, 0.0
      %2363 = vadd.xlane.f32.xlu0 %v2362
      %v2364 = vpop.xlane.xlu0 %2363
      %v2365 = vsel %vm2089, %v2325, 0.0
      %2366 = vadd.xlane.f32.xlu0 %v2365
      %v2367 = vpop.xlane.xlu0 %2366
      %v2368 = vsel %vm2089, %v2326, 0.0
      %2369 = vadd.xlane.f32.xlu0 %v2368
      %v2370 = vpop.xlane.xlu0 %2369
      %v2371 = vsel %vm2089, %v2327, 0.0
      %2372 = vadd.xlane.f32.xlu0 %v2371
      %v2373 = vpop.xlane.xlu0 %2372
      %v2374 = vsel %vm2089, %v2328, 0.0
      %2375 = vadd.xlane.f32.xlu0 %v2374
      %v2376 = vpop.xlane.xlu0 %2375
      %v2377 = vmul.f32 %v1860, %v2331
      %v2378 = vmul.f32 %v1865, %v2334
      %v2379 = vmul.f32 %v1870, %v2337
      %v2380 = vmul.f32 %v1875, %v2340
      %v2381 = vmul.f32 %v1880, %v2343
      %v2382 = vmul.f32 %v1885, %v2346
      %v2383 = vmul.f32 %v1890, %v2349
      %v2384 = vmul.f32 %v1895, %v2352
      %v2385 = vmul.f32 %v1900, %v2355
      %v2386 = vmul.f32 %v1905, %v2358
      %v2387 = vmul.f32 %v1910, %v2361
      %v2388 = vmul.f32 %v1915, %v2364
      %v2389 = vmul.f32 %v1920, %v2367
      %v2390 = vmul.f32 %v1925, %v2370
      %v2391 = vmul.f32 %v1930, %v2373
      %v2392 = vmul.f32 %v1935, %v2376
      %v2393 = vmul.f32 %v1701, 0.125
      %v2394 = vmul.f32 %v1707, 0.125
      %v2395 = vmul.f32 %v1713, 0.125
      %v2396 = vmul.f32 %v1719, 0.125
      %v2397 = vmul.f32 %v1725, 0.125
      %v2398 = vmul.f32 %v1731, 0.125
      %v2399 = vmul.f32 %v1737, 0.125
      %v2400 = vmul.f32 %v1743, 0.125
      %v2401 = vmul.f32 %v1749, 0.125
      %v2402 = vmul.f32 %v1755, 0.125
      %v2403 = vmul.f32 %v1761, 0.125
      %v2404 = vmul.f32 %v1767, 0.125
      %v2405 = vmul.f32 %v1773, 0.125
      %v2406 = vmul.f32 %v1779, 0.125
      %v2407 = vmul.f32 %v1785, 0.125
      %v2408 = vmul.f32 %v1791, 0.125
      %v2409 = vadd.f32 %v2377, %v2393
      %v2410 = vadd.f32 %v2378, %v2394
      %v2411 = vadd.f32 %v2379, %v2395
      %v2412 = vadd.f32 %v2380, %v2396
      %v2413 = vadd.f32 %v2381, %v2397
      %v2414 = vadd.f32 %v2382, %v2398
      %v2415 = vadd.f32 %v2383, %v2399
      %v2416 = vadd.f32 %v2384, %v2400
      %v2417 = vadd.f32 %v2385, %v2401
      %v2418 = vadd.f32 %v2386, %v2402
      %v2419 = vadd.f32 %v2387, %v2403
      %v2420 = vadd.f32 %v2388, %v2404
      %v2421 = vadd.f32 %v2389, %v2405
      %v2422 = vadd.f32 %v2390, %v2406
      %v2423 = vadd.f32 %v2391, %v2407
      %v2424 = vadd.f32 %v2392, %v2408
      %v2425 = vld [vmem:[%s7] sm:$0xff]
      %v2426 = vld [vmem:[%s7 + $0x8] sm:$0xff]
      %v2427 = vld [vmem:[%s7 + $0x10] sm:$0xff]
      %v2428 = vld [vmem:[%s7 + $0x18] sm:$0xff]
      %v2429 = vld [vmem:[%s7 + $0x20] sm:$0xff]
      %v2430 = vld [vmem:[%s7 + $0x28] sm:$0xff]
      %v2431 = vld [vmem:[%s7 + $0x30] sm:$0xff]
      %v2432 = vld [vmem:[%s7 + $0x38] sm:$0xff]
      %2433 = vmatprep.subr.mxu0 0.0
      %2434 = vmatpush1.msra.mxu0 %v2409
      %2435 = vmatprep.subr.mxu0 0.0
      %2436 = vmatpush1.msra.mxu0 %v2410
      %2437 = vmatprep.subr.mxu0 0.0
      %2438 = vmatpush1.msra.mxu0 %v2411
      %2439 = vmatprep.subr.mxu0 0.0
      %2440 = vmatpush1.msra.mxu0 %v2412
      %2441 = vmatprep.subr.mxu0 0.0
      %2442 = vmatpush1.msra.mxu0 %v2413
      %2443 = vmatprep.subr.mxu0 0.0
      %2444 = vmatpush1.msra.mxu0 %v2414
      %2445 = vmatprep.subr.mxu0 0.0
      %2446 = vmatpush1.msra.mxu0 %v2415
      %2447 = vmatprep.subr.mxu0 0.0
      %2448 = vmatpush1.msra.mxu0 %v2416
      %2449 = vmatprep.subr.mxu0 0.0
      %2450 = vmatpush1.msra.mxu0 %v2417
      %2451 = vmatprep.subr.mxu0 0.0
      %2452 = vmatpush1.msra.mxu0 %v2418
      %2453 = vmatprep.subr.mxu0 0.0
      %2454 = vmatpush1.msra.mxu0 %v2419
      %2455 = vmatprep.subr.mxu0 0.0
      %2456 = vmatpush1.msra.mxu0 %v2420
      %2457 = vmatprep.subr.mxu0 0.0
      %2458 = vmatpush1.msra.mxu0 %v2421
      %2459 = vmatprep.subr.mxu0 0.0
      %2460 = vmatpush1.msra.mxu0 %v2422
      %2461 = vmatprep.subr.mxu0 0.0
      %2462 = vmatpush1.msra.mxu0 %v2423
      %2463 = vmatprep.subr.mxu0 0.0
      %2464 = vmatpush1.msra.mxu0 %v2424
      %2465 = vmatprep.subr.mxu0 0.0
      %2466 = vmatpush1.msra.mxu0 0.0
      %2467 = vmatprep.subr.mxu0 0.0
      %2468 = vmatpush1.msra.mxu0 0.0
      %2469 = vmatprep.subr.mxu0 0.0
      %2470 = vmatpush1.msra.mxu0 0.0
      %2471 = vmatprep.subr.mxu0 0.0
      %2472 = vmatpush1.msra.mxu0 0.0
      %2473 = vmatprep.subr.mxu0 0.0
      %2474 = vmatpush1.msra.mxu0 0.0
      %2475 = vmatprep.subr.mxu0 0.0
      %2476 = vmatpush1.msra.mxu0 0.0
      %2477 = vmatprep.subr.mxu0 0.0
      %2478 = vmatpush1.msra.mxu0 0.0
      %2479 = vmatprep.subr.mxu0 0.0
      %2480 = vmatpush1.msra.mxu0 0.0
      %2481 = vmatprep.subr.mxu0 0.0
      %2482 = vmatpush1.msra.mxu0 0.0
      %2483 = vmatprep.subr.mxu0 0.0
      %2484 = vmatpush1.msra.mxu0 0.0
      %2485 = vmatprep.subr.mxu0 0.0
      %2486 = vmatpush1.msra.mxu0 0.0
      %2487 = vmatprep.subr.mxu0 0.0
      %2488 = vmatpush1.msra.mxu0 0.0
      %2489 = vmatprep.subr.mxu0 0.0
      %2490 = vmatpush1.msra.mxu0 0.0
      %2491 = vmatprep.subr.mxu0 0.0
      %2492 = vmatpush1.msra.mxu0 0.0
      %2493 = vmatprep.subr.mxu0 0.0
      %2494 = vmatpush1.msra.mxu0 0.0
      %2495 = vmatprep.subr.mxu0 0.0
      %2496 = vmatpush1.msra.mxu0 0.0
      %2497 = vmatprep.mubr.f32.mxu0 0.0
      %2498 = vmatmul.mubr.f32.gmra.mrb[0].mxu0 %v2425
      %v2499 = vpop.f32.mrb[0].mxu0
      %v2500 = vadd.f32 0.0, %v2499
      %v2501 = vpop.f32.mrb[0].mxu0
      %2502 = vmatprep.mubr.f32.mxu0 0.0
      %2503 = vmatmul.mubr.f32.gmra.mrb[0].mxu0 %v2426
      %v2504 = vpop.f32.mrb[0].mxu0
      %v2505 = vadd.f32 0.0, %v2504
      %v2506 = vpop.f32.mrb[0].mxu0
      %2507 = vmatprep.mubr.f32.mxu0 0.0
      %2508 = vmatmul.mubr.f32.gmra.mrb[0].mxu0 %v2427
      %v2509 = vpop.f32.mrb[0].mxu0
      %v2510 = vadd.f32 0.0, %v2509
      %v2511 = vpop.f32.mrb[0].mxu0
      %2512 = vmatprep.mubr.f32.mxu0 0.0
      %2513 = vmatmul.mubr.f32.gmra.mrb[0].mxu0 %v2428
      %v2514 = vpop.f32.mrb[0].mxu0
      %v2515 = vadd.f32 0.0, %v2514
      %v2516 = vpop.f32.mrb[0].mxu0
      %2517 = vmatprep.mubr.f32.mxu0 0.0
      %2518 = vmatmul.mubr.f32.gmra.mrb[0].mxu0 %v2429
      %v2519 = vpop.f32.mrb[0].mxu0
      %v2520 = vadd.f32 0.0, %v2519
      %v2521 = vpop.f32.mrb[0].mxu0
      %2522 = vmatprep.mubr.f32.mxu0 0.0
      %2523 = vmatmul.mubr.f32.gmra.mrb[0].mxu0 %v2430
      %v2524 = vpop.f32.mrb[0].mxu0
      %v2525 = vadd.f32 0.0, %v2524
      %v2526 = vpop.f32.mrb[0].mxu0
      %2527 = vmatprep.mubr.f32.mxu0 0.0
      %2528 = vmatmul.mubr.f32.gmra.mrb[0].mxu0 %v2431
      %v2529 = vpop.f32.mrb[0].mxu0
      %v2530 = vadd.f32 0.0, %v2529
      %v2531 = vpop.f32.mrb[0].mxu0
      %2532 = vmatprep.mubr.f32.mxu0 0.0
      %2533 = vmatmul.mubr.f32.gmra.mrb[0].mxu0 %v2432
      %v2534 = vpop.f32.mrb[0].mxu0
      %v2535 = vadd.f32 0.0, %v2534
      %v2536 = vpop.f32.mrb[0].mxu0
      %2537 = vdwg.mxu0
      %v2538 = vld [vmem:[%s2] sm:$0xff]
      %v2539 = vld [vmem:[%s2 + $0x8] sm:$0xff]
      %v2540 = vld [vmem:[%s2 + $0x10] sm:$0xff]
      %v2541 = vld [vmem:[%s2 + $0x18] sm:$0xff]
      %v2542 = vld [vmem:[%s2 + $0x20] sm:$0xff]
      %v2543 = vld [vmem:[%s2 + $0x28] sm:$0xff]
      %v2544 = vld [vmem:[%s2 + $0x30] sm:$0xff]
      %v2545 = vld [vmem:[%s2 + $0x38] sm:$0xff]
      %v2546 = vld [vmem:[%s2 + $0x40] sm:$0xff]
      %v2547 = vld [vmem:[%s2 + $0x48] sm:$0xff]
      %v2548 = vld [vmem:[%s2 + $0x50] sm:$0xff]
      %v2549 = vld [vmem:[%s2 + $0x58] sm:$0xff]
      %v2550 = vld [vmem:[%s2 + $0x60] sm:$0xff]
      %v2551 = vld [vmem:[%s2 + $0x68] sm:$0xff]
      %v2552 = vld [vmem:[%s2 + $0x70] sm:$0xff]
      %v2553 = vld [vmem:[%s2 + $0x78] sm:$0xff]
      %v2554 = vld [vmem:[%s3] sm:$0x1]
      %v2556 = vlaneseq
      %v2557 = vshrl.u32 %v2556, 7
      %v2558 = vsub.s32 0, %v2557
      %v2559 = vrot.slane %v2554, %v2558
      %2561 = vmatprep.subr.mxu0 0.0
      %2562 = vmatpush1.msra.mxu0 %v2538
      %2563 = vmatprep.subr.mxu0 0.0
      %2564 = vmatpush1.msra.mxu0 %v2539
      %2565 = vmatprep.subr.mxu0 0.0
      %2566 = vmatpush1.msra.mxu0 %v2540
      %2567 = vmatprep.subr.mxu0 0.0
      %2568 = vmatpush1.msra.mxu0 %v2541
      %2569 = vmatprep.subr.mxu0 0.0
      %2570 = vmatpush1.msra.mxu0 %v2542
      %2571 = vmatprep.subr.mxu0 0.0
      %2572 = vmatpush1.msra.mxu0 %v2543
      %2573 = vmatprep.subr.mxu0 0.0
      %2574 = vmatpush1.msra.mxu0 %v2544
      %2575 = vmatprep.subr.mxu0 0.0
      %2576 = vmatpush1.msra.mxu0 %v2545
      %2577 = vmatprep.subr.mxu0 0.0
      %2578 = vmatpush1.msra.mxu0 %v2546
      %2579 = vmatprep.subr.mxu0 0.0
      %2580 = vmatpush1.msra.mxu0 %v2547
      %2581 = vmatprep.subr.mxu0 0.0
      %2582 = vmatpush1.msra.mxu0 %v2548
      %2583 = vmatprep.subr.mxu0 0.0
      %2584 = vmatpush1.msra.mxu0 %v2549
      %2585 = vmatprep.subr.mxu0 0.0
      %2586 = vmatpush1.msra.mxu0 %v2550
      %2587 = vmatprep.subr.mxu0 0.0
      %2588 = vmatpush1.msra.mxu0 %v2551
      %2589 = vmatprep.subr.mxu0 0.0
      %2590 = vmatpush1.msra.mxu0 %v2552
      %2591 = vmatprep.subr.mxu0 0.0
      %2592 = vmatpush1.msra.mxu0 %v2553
      %2593 = vmatprep.subr.mxu0 0.0
      %2594 = vmatpush1.msra.mxu0 0.0
      %2595 = vmatprep.subr.mxu0 0.0
      %2596 = vmatpush1.msra.mxu0 0.0
      %2597 = vmatprep.subr.mxu0 0.0
      %2598 = vmatpush1.msra.mxu0 0.0
      %2599 = vmatprep.subr.mxu0 0.0
      %2600 = vmatpush1.msra.mxu0 0.0
      %2601 = vmatprep.subr.mxu0 0.0
      %2602 = vmatpush1.msra.mxu0 0.0
      %2603 = vmatprep.subr.mxu0 0.0
      %2604 = vmatpush1.msra.mxu0 0.0
      %2605 = vmatprep.subr.mxu0 0.0
      %2606 = vmatpush1.msra.mxu0 0.0
      %2607 = vmatprep.subr.mxu0 0.0
      %2608 = vmatpush1.msra.mxu0 0.0
      %2609 = vmatprep.subr.mxu0 0.0
      %2610 = vmatpush1.msra.mxu0 0.0
      %2611 = vmatprep.subr.mxu0 0.0
      %2612 = vmatpush1.msra.mxu0 0.0
      %2613 = vmatprep.subr.mxu0 0.0
      %2614 = vmatpush1.msra.mxu0 0.0
      %2615 = vmatprep.subr.mxu0 0.0
      %2616 = vmatpush1.msra.mxu0 0.0
      %2617 = vmatprep.subr.mxu0 0.0
      %2618 = vmatpush1.msra.mxu0 0.0
      %2619 = vmatprep.subr.mxu0 0.0
      %2620 = vmatpush1.msra.mxu0 0.0
      %2621 = vmatprep.subr.mxu0 0.0
      %2622 = vmatpush1.msra.mxu0 0.0
      %2623 = vmatprep.subr.mxu0 0.0
      %2624 = vmatpush1.msra.mxu0 0.0
      %2625 = vmatprep.mubr.f32.mxu0 0.0
      %2626 = vmatmul.mubr.f32.gmra.mrb[0].mxu0 %v2500
      %v2627 = vpop.f32.mrb[0].mxu0
      %v2628 = vadd.f32 %v2559, %v2627
      %v2629 = vpop.f32.mrb[0].mxu0
      %2630 = vmatprep.mubr.f32.mxu0 0.0
      %2631 = vmatmul.mubr.f32.gmra.mrb[0].mxu0 %v2505
      %v2632 = vpop.f32.mrb[0].mxu0
      %v2633 = vadd.f32 %v2559, %v2632
      %v2634 = vpop.f32.mrb[0].mxu0
      %2635 = vmatprep.mubr.f32.mxu0 0.0
      %2636 = vmatmul.mubr.f32.gmra.mrb[0].mxu0 %v2510
      %v2637 = vpop.f32.mrb[0].mxu0
      %v2638 = vadd.f32 %v2559, %v2637
      %v2639 = vpop.f32.mrb[0].mxu0
      %2640 = vmatprep.mubr.f32.mxu0 0.0
      %2641 = vmatmul.mubr.f32.gmra.mrb[0].mxu0 %v2515
      %v2642 = vpop.f32.mrb[0].mxu0
      %v2643 = vadd.f32 %v2559, %v2642
      %v2644 = vpop.f32.mrb[0].mxu0
      %2645 = vmatprep.mubr.f32.mxu0 0.0
      %2646 = vmatmul.mubr.f32.gmra.mrb[0].mxu0 %v2520
      %v2647 = vpop.f32.mrb[0].mxu0
      %v2648 = vadd.f32 %v2559, %v2647
      %v2649 = vpop.f32.mrb[0].mxu0
      %2650 = vmatprep.mubr.f32.mxu0 0.0
      %2651 = vmatmul.mubr.f32.gmra.mrb[0].mxu0 %v2525
      %v2652 = vpop.f32.mrb[0].mxu0
      %v2653 = vadd.f32 %v2559, %v2652
      %v2654 = vpop.f32.mrb[0].mxu0
      %2655 = vmatprep.mubr.f32.mxu0 0.0
      %2656 = vmatmul.mubr.f32.gmra.mrb[0].mxu0 %v2530
      %v2657 = vpop.f32.mrb[0].mxu0
      %v2658 = vadd.f32 %v2559, %v2657
      %v2659 = vpop.f32.mrb[0].mxu0
      %2660 = vmatprep.mubr.f32.mxu0 0.0
      %2661 = vmatmul.mubr.f32.gmra.mrb[0].mxu0 %v2535
      %v2662 = vpop.f32.mrb[0].mxu0
      %v2663 = vadd.f32 %v2559, %v2662
      %v2664 = vpop.f32.mrb[0].mxu0
      %2665 = vdwg.mxu0
      %v2666 = vmax.f32 %v2628, 0.0
      %v2667 = vmax.f32 %v2633, 0.0
      %v2668 = vmax.f32 %v2638, 0.0
      %v2669 = vmax.f32 %v2643, 0.0
      %v2670 = vmax.f32 %v2648, 0.0
      %v2671 = vmax.f32 %v2653, 0.0
      %v2672 = vmax.f32 %v2658, 0.0
      %v2673 = vmax.f32 %v2663, 0.0
      %2674 = vst [vmem:[%s307] sm:$0xff] %v2666
      %2675 = vst [vmem:[%s307 + $0x8] sm:$0xff] %v2667
      %2676 = vst [vmem:[%s307 + $0x10] sm:$0xff] %v2668
      %2677 = vst [vmem:[%s307 + $0x18] sm:$0xff] %v2669
      %2678 = vst [vmem:[%s307 + $0x20] sm:$0xff] %v2670
      %2679 = vst [vmem:[%s307 + $0x28] sm:$0xff] %v2671
      %2680 = vst [vmem:[%s307 + $0x30] sm:$0xff] %v2672
      %2681 = vst [vmem:[%s307 + $0x38] sm:$0xff] %v2673
      %s2682 = smul.u32 8, %s19
      %p2683 = scmp.lt.s32.totalorder %s2682, 15
      %s2684 = scalar_select %p2683, %s2682, 15
      %s2685 = smul.addr %s2684, 8
      %s2686 = scalar_lea.vmem %s8, %s2685
      // Predicated region
      $region53: #{emn_forward_batched.1} parent=51 // pred_check
        %p2687 = pneg %p210
      $region54: #{emn_forward_batched.1} parent=51 // pred_check_branch
        %2689 = sbr.rel (%p2687) target = $region56
      $region55: #{emn_forward_batched.1} parent=51 // pred_region
        %s2690 = smul.u32 8, %s19
      $region56: #{emn_forward_batched.1} parent=51 // pred_fallthru
        _
    $region52: #{emn_forward_batched.1} parent=5 // pred_fallthru
      _
    %p2691 = scmp.le.s32.totalorder 2, %s14
    // Predicated region
    $region57: #{emn_forward_batched.1} parent=5 // pred_check
      %p2692 = pneg %p2691
    $region58: #{emn_forward_batched.1} parent=5 // pred_check_branch
      %2694 = sbr.rel (%p2692) target = $region60
    $region59: #{emn_forward_batched.1} parent=5 // pred_region
      %s2695 = ssub.s32 %s14, 2
      // Predicated region
      $region61: #{emn_forward_batched.1} parent=59 // pred_check
        %p2696 = pneg %p216
      $region62: #{emn_forward_batched.1} parent=59 // pred_check_branch
        %2698 = sbr.rel (%p2696) target = $region64
      $region63: #{emn_forward_batched.1} parent=59 // pred_region
        %s2699 = smul.u32 8, %s20
        %p2700 = scmp.lt.s32.totalorder %s2699, 15
        %s2701 = scalar_select %p2700, %s2699, 15
        %s2702 = smul.addr %s2701, 8
        %s2703 = scalar_lea.vmem %s8, %s2702
      $region64: #{emn_forward_batched.1} parent=59 // pred_fallthru
        _
    $region60: #{emn_forward_batched.1} parent=5 // pred_fallthru
      _
  $region6: #{emn_forward_batched.1} parent=0 // loop_footer
    %s18 = sadd.s32 1, %s14
  $region7: #{emn_forward_batched.1} parent=0 // loop_footer_branch
    %13 = sbr.rel target = $region3
  $region8: #{emn_forward_batched.1} parent=0 // loop_exit
    _

</llo_original>
